<compile_context>
chip_gen: v7x
topology: tpu7x:2x2x1
jax: 0.10.0
libtpu: 0.0.40
codegen_flags: <defaults>
</compile_context>

<pallas_src>
import functools

import jax
import jax.numpy as jnp
from jax import lax
from jax.experimental import pallas as pl
from jax.experimental.pallas import tpu as pltpu


OUT_LANES = 128  # lane-dense output block for the per-sequence log-normalizer


# ----------------------------- tiling helpers ------------------------------

def _pick_tile(dim, cap, align):
    """Largest tile <= cap that divides `dim` and is a multiple of `align`;
    falls back to the full dim (a single full-extent block is always legal)."""
    if dim <= cap:
        return dim
    c = (cap // align) * align
    while c >= align:
        if dim % c == 0:
            return c
        c -= align
    return dim


# ------------------------------ lm_head kernel ------------------------------

def _lm_head_kernel(x_ref, w_ref, b_ref, o_ref, acc_ref):
    # x: (tm, tk) bf16, w: (tk, tn) bf16, b: (1, tn) f32 -> o: (tm, tn) f32
    @pl.when(pl.program_id(2) == 0)
    def _init():
        acc_ref[...] = jnp.zeros_like(acc_ref)

    acc_ref[...] += jnp.dot(
        x_ref[...], w_ref[...], preferred_element_type=jnp.float32
    )

    @pl.when(pl.program_id(2) == pl.num_programs(2) - 1)
    def _finalize():
        o_ref[...] = (acc_ref[...] + b_ref[...]).astype(o_ref.dtype)


def lm_head_pallas(x2d, w, b):
    N, E = x2d.shape
    V = w.shape[1]
    tm = _pick_tile(N, 256, 8)     # sublane-aligned row tile
    tn = _pick_tile(V, 512, 128)   # lane-aligned vocab tile
    tk = _pick_tile(E, 512, 128)   # reduction tile
    return pl.pallas_call(
        _lm_head_kernel,
        out_shape=jax.ShapeDtypeStruct((N, V), jnp.float32),
        grid=(N // tm, V // tn, E // tk),
        in_specs=[
            pl.BlockSpec((tm, tk), lambda i, j, k: (i, k)),
            pl.BlockSpec((tk, tn), lambda i, j, k: (k, j)),
            pl.BlockSpec((1, tn), lambda i, j, k: (0, j)),
        ],
        out_specs=pl.BlockSpec((tm, tn), lambda i, j, k: (i, j)),
        scratch_shapes=[pltpu.VMEM((tm, tn), jnp.float32)],
        compiler_params=pltpu.CompilerParams(
            dimension_semantics=("parallel", "parallel", "arbitrary")
        ),
    )(x2d.astype(jnp.bfloat16), w.astype(jnp.bfloat16),
      b.reshape(1, V).astype(jnp.float32))


# ----------------------- beam transition matrices (MXU) ----------------------

def _beam_trans_kernel(e1_ref, e2_ref, o_ref):
    # e1, e2: (nt, K, R) bf16 -> o: (nt, K, K) f32
    # o[n, j, k] = sum_r e1[n, j, r] * e2[n, k, r]   (prev beam j -> next beam k)
    o_ref[...] = jnp.einsum(
        "njr,nkr->njk", e1_ref[...], e2_ref[...],
        preferred_element_type=jnp.float32,
    )


def beam_transitions_pallas(e1_slab, e2_slab):
    N, K, R = e1_slab.shape
    nt = _pick_tile(N, 256, 1)
    return pl.pallas_call(
        _beam_trans_kernel,
        out_shape=jax.ShapeDtypeStruct((N, K, K), jnp.float32),
        grid=(N // nt,),
        in_specs=[
            pl.BlockSpec((nt, K, R), lambda n: (n, 0, 0)),
            pl.BlockSpec((nt, K, R), lambda n: (n, 0, 0)),
        ],
        out_specs=pl.BlockSpec((nt, K, K), lambda n: (n, 0, 0)),
        compiler_params=pltpu.CompilerParams(
            dimension_semantics=("parallel",)
        ),
    )(e1_slab.astype(jnp.bfloat16), e2_slab.astype(jnp.bfloat16))


# ---------------------- CRF log-normalizer (serial scan) ---------------------

def _crf_scan_kernel(bem_ref, trans_ref, mask_ref, out_ref, score_ref):
    # One batch element per grid program (batch dim squeezed by the BlockSpec).
    #   bem  : (T, 1, K)    beam emission scores
    #   trans: (T-1, K, K)  trans[t, j, k]: beam j at t -> beam k at t+1
    #   mask : (T, 1, K)    {0., 1.} valid-position mask (broadcast over beams)
    #   out  : (1, 128)     log-normalizer, broadcast across lanes
    #   score_ref scratch: (1, K) running forward score
    T = bem_ref.shape[0]

    # NOTE: like the reference CRF, position 0 is assumed to be unmasked.
    score_ref[...] = bem_ref[0]                                   # (1, K)

    def step(i, carry):
        score = score_ref[...]                                    # (1, K)
        x = jnp.transpose(score) + trans_ref[i - 1]               # (K, K)
        m = jnp.max(x, axis=0, keepdims=True)                     # (1, K)
        nxt = m + jnp.log(jnp.sum(jnp.exp(x - m), axis=0, keepdims=True))
        nxt = nxt + bem_ref[i]                                    # (1, K)
        score_ref[...] = jnp.where(mask_ref[i] > 0.5, nxt, score)
        return carry

    lax.fori_loop(1, T, step, 0)

    score = score_ref[...]
    m = jnp.max(score, axis=1, keepdims=True)                     # (1, 1)
    z = m + jnp.log(jnp.sum(jnp.exp(score - m), axis=1, keepdims=True))
    out_ref[...] = jnp.broadcast_to(z, out_ref.shape)             # (1, 128)


def crf_normalizer_pallas(beam_em4, trans4, mask4):
    # beam_em4: (B, T, 1, K)   trans4: (B, T-1, K, K)   mask4: (B, T, 1, K)
    B, T = beam_em4.shape[0], beam_em4.shape[1]
    K = beam_em4.shape[3]
    out = pl.pallas_call(
        _crf_scan_kernel,
        out_shape=jax.ShapeDtypeStruct((B, 1, OUT_LANES), jnp.float32),
        grid=(B,),
        in_specs=[
            pl.BlockSpec((None, T, 1, K), lambda b: (b, 0, 0, 0)),
            pl.BlockSpec((None, T - 1, K, K), lambda b: (b, 0, 0, 0)),
            pl.BlockSpec((None, T, 1, K), lambda b: (b, 0, 0, 0)),
        ],
        out_specs=pl.BlockSpec((None, 1, OUT_LANES), lambda b: (b, 0, 0)),
        scratch_shapes=[pltpu.VMEM((1, K), jnp.float32)],
        compiler_params=pltpu.CompilerParams(
            dimension_semantics=("parallel",)
        ),
    )(beam_em4, trans4, mask4)
    return out[:, 0, 0]


# ------------------------------ CRF (glue) ----------------------------------

def crf_numerator(logits, targets, maskf, E1, E2):
    # score of the gold sequence (emissions at targets + low-rank transitions)
    em = jnp.take_along_axis(logits, targets[:, :, None], axis=2)[:, :, 0]  # (B,T)
    t1 = E1[targets[:, :-1]]                       # (B, T-1, R)
    t2 = E2[targets[:, 1:]]                        # (B, T-1, R)
    trans = jnp.sum(t1 * t2, axis=-1)              # (B, T-1)
    scores = em.at[:, 1:].add(trans)
    return (scores * maskf).sum(-1)


def crf_denominator(logits, targets, maskf, E1, E2, beam):
    B, T, V = logits.shape
    R = E1.shape[1]
    K = beam
    bidx = jnp.arange(B)[:, None]
    tidx = jnp.arange(T)[None, :]
    # Force the gold tag into the beam with a large finite score (avoids inf/nan
    # propagation through top_k), then keep the top-`beam` candidates.
    scattered = logits.at[bidx, tidx, targets].set(jnp.float32(1e9))
    _, beam_targets = lax.top_k(scattered, K)                        # (B,T,K)
    beam_em = jnp.take_along_axis(logits, beam_targets, axis=2)      # (B,T,K)

    if T == 1:
        m = jnp.max(beam_em[:, 0, :], axis=-1)
        return m + jnp.log(jnp.sum(jnp.exp(beam_em[:, 0, :] - m[:, None]), axis=-1))

    # All (T-1)*B low-rank transition matrices in one batched MXU pass.
    e1_slab = E1[beam_targets[:, :-1]].reshape(B * (T - 1), K, R)    # prev step
    e2_slab = E2[beam_targets[:, 1:]].reshape(B * (T - 1), K, R)     # next step
    trans = beam_transitions_pallas(e1_slab, e2_slab)                # (B*(T-1),K,K)
    trans4 = trans.reshape(B, T - 1, K, K)

    beam_em4 = beam_em.reshape(B, T, 1, K)
    mask4 = jnp.broadcast_to(maskf[:, :, None, None], (B, T, 1, K))
    return crf_normalizer_pallas(beam_em4, trans4, mask4)


# ---------------------------- CRFModel forward ------------------------------

def crf_model_forward(params, query, context, target, padding_idx, beam):
    # Synthetic backbone standing in for `self.model(query, context)`:
    # token embedding of the query + mean-pooled context embedding.
    # TODO(synk): the real backbone is an external module; only its output
    # contract ((B, S, E) activations) is reproduced here.
    modelout = params["emb_q"][query] + jnp.mean(
        params["emb_c"][context], axis=1, keepdims=True
    )                                                        # (B, S, E)
    B, S, E = modelout.shape
    V = params["lm_w"].shape[1]

    # PyTorch: lm_head(modelout.transpose(0,1).view(-1,E)).view(S,B,V).transpose(0,1)
    # is exactly a per-position Linear; apply it on the (B*S, E) slab directly so
    # no transposes of the (B,S,V) logits are materialized in HBM.
    logits2d = lm_head_pallas(modelout.reshape(B * S, E),
                              params["lm_w"], params["lm_b"])
    logits = logits2d.reshape(B, S, V)

    maskf = (target != padding_idx).astype(jnp.float32)

    num = crf_numerator(logits, target, maskf, params["E1"], params["E2"])
    den = crf_denominator(logits, target, maskf, params["E1"], params["E2"], beam)
    crf_losses = (num - den) * -1.0
    return logits, crf_losses


# --------------------------------- main -------------------------------------

if __name__ == "__main__":
    # small shapes consistent with the module's forward
    batch, seq, ctx_len = 2, 8, 6
    embed_dim, vocab_size = 32, 128
    beam, low_rank, padding_idx = 8, 16, 0

    key = jax.random.PRNGKey(0)
    k = jax.random.split(key, 8)

    params = {
        "emb_q": 0.1 * jax.random.normal(k[0], (vocab_size, embed_dim), jnp.float32),
        "emb_c": 0.1 * jax.random.normal(k[1], (vocab_size, embed_dim), jnp.float32),
        "lm_w": 0.1 * jax.random.normal(k[2], (embed_dim, vocab_size), jnp.float32),
        "lm_b": 0.01 * jax.random.normal(k[3], (vocab_size,), jnp.float32),
        "E1": 0.1 * jax.random.normal(k[4], (vocab_size, low_rank), jnp.float32),
        "E2": 0.1 * jax.random.normal(k[5], (vocab_size, low_rank), jnp.float32),
    }

    query = jax.random.randint(k[6], (batch, seq), 1, vocab_size, dtype=jnp.int32)
    context = jax.random.randint(k[7], (batch, ctx_len), 1, vocab_size, dtype=jnp.int32)
    target = jax.random.randint(
        jax.random.fold_in(key, 99), (batch, seq), 1, vocab_size, dtype=jnp.int32
    )
    # add some padding positions so the masked recursion path is exercised
    target = target.at[0, -2:].set(padding_idx).at[1, -1:].set(padding_idx)

    # TODO(synk): inference()/viterbi_decode (argmax beam search) not implemented;
    # only the training forward pass (logits, CRF loss) is reproduced here.
    fwd = jax.jit(
        functools.partial(crf_model_forward, padding_idx=padding_idx, beam=beam)
    )
    logits, crf_losses = fwd(params, query, context, target)
    jax.block_until_ready((logits, crf_losses))

    assert logits.shape == (batch, seq, vocab_size)
    assert crf_losses.shape == (batch,)
    assert bool(jnp.all(jnp.isfinite(logits)))
    assert bool(jnp.all(jnp.isfinite(crf_losses)))
    print("KERNEL_OK")
</pallas_src>

<mosaic_0001>
module attributes {stable_mosaic.version = 11 : i64} {
  func.func @_lm_head_kernel(%arg0: i32, %arg1: i32, %arg2: i32, %arg3: memref<16x32xbf16, #tpu.memory_space<vmem>>, %arg4: memref<32x128xbf16, #tpu.memory_space<vmem>>, %arg5: memref<1x128xf32, #tpu.memory_space<vmem>>, %arg6: memref<16x128xf32, #tpu.memory_space<vmem>>, %arg7: memref<16x128xf32, #tpu.memory_space<vmem>>) attributes {dimension_semantics = [#tpu.dimension_semantics<parallel>, #tpu.dimension_semantics<parallel>, #tpu.dimension_semantics<arbitrary>], iteration_bounds = array<i64: 1, 1, 1>, scalar_prefetch = 0 : i64, scratch_operands = 1 : i64, tpu.core_type = #tpu.core_type<tc>, window_params = [{transform_indices = @transform_0, window_bounds = array<i64: 16, 32>}, {transform_indices = @transform_1, window_bounds = array<i64: 32, 128>}, {transform_indices = @transform_2, window_bounds = array<i64: 1, 128>}, {transform_indices = @transform_3, window_bounds = array<i64: 16, 128>}]} {
    %c0_i32 = arith.constant 0 : i32
    %0 = arith.cmpi eq, %arg2, %c0_i32 : i32
    %1 = arith.extui %0 : i1 to i32
    %c0_i32_0 = arith.constant 0 : i32
    %2 = arith.cmpi ne, %1, %c0_i32_0 : i32
    scf.if %2 {
      %cst_10 = arith.constant 0.000000e+00 : f32
      %12 = vector.broadcast %cst_10 : f32 to vector<16x128xf32>
      %c0_11 = arith.constant 0 : index
      %c0_12 = arith.constant 0 : index
      %13 = vector.load %arg7[%c0_11, %c0_12] : memref<16x128xf32, #tpu.memory_space<vmem>>, vector<16x128xf32>
      tpu.vector_store %arg7[%c0_11, %c0_12], %12 {strides = array<i32>} : memref<16x128xf32, #tpu.memory_space<vmem>>, vector<16x128xf32>,
    } else {
    }
    %c0 = arith.constant 0 : index
    %c0_1 = arith.constant 0 : index
    %3 = vector.load %arg7[%c0, %c0_1] : memref<16x128xf32, #tpu.memory_space<vmem>>, vector<16x128xf32>
    %c0_2 = arith.constant 0 : index
    %c0_3 = arith.constant 0 : index
    %4 = vector.load %arg3[%c0_2, %c0_3] : memref<16x32xbf16, #tpu.memory_space<vmem>>, vector<16x32xbf16>
    %c0_4 = arith.constant 0 : index
    %c0_5 = arith.constant 0 : index
    %5 = vector.load %arg4[%c0_4, %c0_5] : memref<32x128xbf16, #tpu.memory_space<vmem>>, vector<32x128xbf16>
    %cst = arith.constant dense<0.000000e+00> : vector<16x128xf32>
    %6 = tpu.matmul %4, %5, %cst {dimension_numbers = #tpu.dot_dimension_numbers<[1], [0], [0], [1], [0, 0, 1, 1], [], []>} : vector<16x32xbf16>, vector<32x128xbf16>, vector<16x128xf32> -> vector<16x128xf32>
    %7 = arith.addf %3, %6 : vector<16x128xf32>
    %c0_6 = arith.constant 0 : index
    %c0_7 = arith.constant 0 : index
    %8 = vector.load %arg7[%c0_6, %c0_7] : memref<16x128xf32, #tpu.memory_space<vmem>>, vector<16x128xf32>
    tpu.vector_store %arg7[%c0_6, %c0_7], %7 {strides = array<i32>} : memref<16x128xf32, #tpu.memory_space<vmem>>, vector<16x128xf32>,
    %c0_i32_8 = arith.constant 0 : i32
    %9 = arith.cmpi eq, %arg2, %c0_i32_8 : i32
    %10 = arith.extui %9 : i1 to i32
    %c0_i32_9 = arith.constant 0 : i32
    %11 = arith.cmpi ne, %10, %c0_i32_9 : i32
    scf.if %11 {
      %c0_10 = arith.constant 0 : index
      %c0_11 = arith.constant 0 : index
      %12 = vector.load %arg7[%c0_10, %c0_11] : memref<16x128xf32, #tpu.memory_space<vmem>>, vector<16x128xf32>
      %c0_12 = arith.constant 0 : index
      %c0_13 = arith.constant 0 : index
      %13 = vector.load %arg5[%c0_12, %c0_13] : memref<1x128xf32, #tpu.memory_space<vmem>>, vector<1x128xf32>
      %14 = vector.broadcast %13 : vector<1x128xf32> to vector<16x128xf32>
      %15 = arith.addf %12, %14 : vector<16x128xf32>
      %c0_14 = arith.constant 0 : index
      %c0_15 = arith.constant 0 : index
      %16 = vector.load %arg6[%c0_14, %c0_15] : memref<16x128xf32, #tpu.memory_space<vmem>>, vector<16x128xf32>
      tpu.vector_store %arg6[%c0_14, %c0_15], %15 {strides = array<i32>} : memref<16x128xf32, #tpu.memory_space<vmem>>, vector<16x128xf32>,
    } else {
    }
    return
  }
  func.func @transform_0(%arg0: i32, %arg1: i32, %arg2: i32) -> (i32, i32) {
    %c0_i32 = arith.constant 0 : i32
    return %arg0, %arg2 : i32, i32
  }
  func.func @transform_1(%arg0: i32, %arg1: i32, %arg2: i32) -> (i32, i32) {
    %c0_i32 = arith.constant 0 : i32
    return %arg2, %arg1 : i32, i32
  }
  func.func @transform_2(%arg0: i32, %arg1: i32, %arg2: i32) -> (i32, i32) {
    %c0_i32 = arith.constant 0 : i32
    %c0_i32_0 = arith.constant 0 : i32
    return %c0_i32, %arg1 : i32, i32
  }
  func.func @transform_3(%arg0: i32, %arg1: i32, %arg2: i32) -> (i32, i32) {
    %c0_i32 = arith.constant 0 : i32
    return %arg0, %arg1 : i32, i32
  }
}

module attributes {stable_mosaic.version = 11 : i64} {
  func.func @_beam_trans_kernel(%arg0: i32, %arg1: memref<14x8x16xbf16, #tpu.memory_space<vmem>>, %arg2: memref<14x8x16xbf16, #tpu.memory_space<vmem>>, %arg3: memref<14x8x8xf32, #tpu.memory_space<vmem>>) attributes {dimension_semantics = [#tpu.dimension_semantics<parallel>], iteration_bounds = array<i64: 1>, scalar_prefetch = 0 : i64, scratch_operands = 0 : i64, tpu.core_type = #tpu.core_type<tc>, window_params = [{transform_indices = @transform_0, window_bounds = array<i64: 14, 8, 16>}, {transform_indices = @transform_1, window_bounds = array<i64: 14, 8, 16>}, {transform_indices = @transform_2, window_bounds = array<i64: 14, 8, 8>}]} {
    %c0 = arith.constant 0 : index
    %c0_0 = arith.constant 0 : index
    %c0_1 = arith.constant 0 : index
    %0 = vector.load %arg1[%c0, %c0_0, %c0_1] : memref<14x8x16xbf16, #tpu.memory_space<vmem>>, vector<14x8x16xbf16>
    %c0_2 = arith.constant 0 : index
    %c0_3 = arith.constant 0 : index
    %c0_4 = arith.constant 0 : index
    %1 = vector.load %arg2[%c0_2, %c0_3, %c0_4] : memref<14x8x16xbf16, #tpu.memory_space<vmem>>, vector<14x8x16xbf16>
    "tpu.trace_start"() <{level = 10 : i32, message = "njr,nkr->njk"}> : () -> ()
    %cst = arith.constant dense<0.000000e+00> : vector<14x8x8xf32>
    %2 = tpu.matmul %0, %1, %cst {dimension_numbers = #tpu.dot_dimension_numbers<[2], [2], [1], [1], [0, 0, 0, 1, 1, 1], [0], [0]>} : vector<14x8x16xbf16>, vector<14x8x16xbf16>, vector<14x8x8xf32> -> vector<14x8x8xf32>
    "tpu.trace_stop"() : () -> ()
    %c0_5 = arith.constant 0 : index
    %c0_6 = arith.constant 0 : index
    %c0_7 = arith.constant 0 : index
    %3 = vector.load %arg3[%c0_5, %c0_6, %c0_7] : memref<14x8x8xf32, #tpu.memory_space<vmem>>, vector<14x8x8xf32>
    tpu.vector_store %arg3[%c0_5, %c0_6, %c0_7], %2 {strides = array<i32>} : memref<14x8x8xf32, #tpu.memory_space<vmem>>, vector<14x8x8xf32>,
    return
  }
  func.func @transform_0(%arg0: i32) -> (i32, i32, i32) {
    %c0_i32 = arith.constant 0 : i32
    %c0_i32_0 = arith.constant 0 : i32
    %c0_i32_1 = arith.constant 0 : i32
    return %arg0, %c0_i32, %c0_i32_0 : i32, i32, i32
  }
  func.func @transform_1(%arg0: i32) -> (i32, i32, i32) {
    %c0_i32 = arith.constant 0 : i32
    %c0_i32_0 = arith.constant 0 : i32
    %c0_i32_1 = arith.constant 0 : i32
    return %arg0, %c0_i32, %c0_i32_0 : i32, i32, i32
  }
  func.func @transform_2(%arg0: i32) -> (i32, i32, i32) {
    %c0_i32 = arith.constant 0 : i32
    %c0_i32_0 = arith.constant 0 : i32
    %c0_i32_1 = arith.constant 0 : i32
    return %arg0, %c0_i32, %c0_i32_0 : i32, i32, i32
  }
}

module attributes {stable_mosaic.version = 11 : i64} {
  func.func @_crf_scan_kernel(%arg0: i32, %arg1: memref<1x8x1x8xf32, #tpu.memory_space<vmem>>, %arg2: memref<1x7x8x8xf32, #tpu.memory_space<vmem>>, %arg3: memref<1x8x1x8xf32, #tpu.memory_space<vmem>>, %arg4: memref<1x1x128xf32, #tpu.memory_space<vmem>>, %arg5: memref<1x8xf32, #tpu.memory_space<vmem>>) attributes {dimension_semantics = [#tpu.dimension_semantics<parallel>], iteration_bounds = array<i64: 2>, scalar_prefetch = 0 : i64, scratch_operands = 1 : i64, tpu.core_type = #tpu.core_type<tc>, window_params = [{transform_indices = @transform_0, window_bounds = array<i64: 1, 8, 1, 8>}, {transform_indices = @transform_1, window_bounds = array<i64: 1, 7, 8, 8>}, {transform_indices = @transform_2, window_bounds = array<i64: 1, 8, 1, 8>}, {transform_indices = @transform_3, window_bounds = array<i64: 1, 1, 128>}]} {
    %c0 = arith.constant 0 : index
    %c0_0 = arith.constant 0 : index
    %c0_1 = arith.constant 0 : index
    %c0_2 = arith.constant 0 : index
    %0 = vector.load %arg1[%c0, %c0_0, %c0_1, %c0_2] : memref<1x8x1x8xf32, #tpu.memory_space<vmem>>, vector<1x1x1x8xf32>
    %1 = vector.shape_cast %0 : vector<1x1x1x8xf32> to vector<1x8xf32>
    %c0_3 = arith.constant 0 : index
    %c0_4 = arith.constant 0 : index
    %2 = vector.load %arg5[%c0_3, %c0_4] : memref<1x8xf32, #tpu.memory_space<vmem>>, vector<1x8xf32>
    tpu.vector_store %arg5[%c0_3, %c0_4], %1 {strides = array<i32>} : memref<1x8xf32, #tpu.memory_space<vmem>>, vector<1x8xf32>,
    %c1_i32 = arith.constant 1 : i32
    %c7_i32 = arith.constant 7 : i32
    %3 = arith.addi %c1_i32, %c7_i32 : i32
    %c1_i32_5 = arith.constant 1 : i32
    scf.for %arg6 = %c1_i32 to %3 step %c1_i32_5  : i32 {
      %c0_13 = arith.constant 0 : index
      %c0_14 = arith.constant 0 : index
      %19 = vector.load %arg5[%c0_13, %c0_14] : memref<1x8xf32, #tpu.memory_space<vmem>>, vector<1x8xf32>
      %20 = tpu.transpose %19, [1, 0] : vector<1x8xf32> -> vector<8x1xf32>
      %c1_i32_15 = arith.constant 1 : i32
      %21 = arith.subi %arg6, %c1_i32_15 : i32
      %c0_16 = arith.constant 0 : index
      %22 = arith.index_cast %21 : i32 to index
      %c0_17 = arith.constant 0 : index
      %c0_18 = arith.constant 0 : index
      %23 = vector.load %arg2[%c0_16, %22, %c0_17, %c0_18] : memref<1x7x8x8xf32, #tpu.memory_space<vmem>>, vector<1x1x8x8xf32>
      %24 = vector.shape_cast %23 : vector<1x1x8x8xf32> to vector<8x8xf32>
      %25 = vector.broadcast %20 : vector<8x1xf32> to vector<8x8xf32>
      %26 = arith.addf %25, %24 : vector<8x8xf32>
      %cst_19 = arith.constant dense<0xFF800000> : vector<8xf32>
      %27 = vector.multi_reduction <maximumf>, %26, %cst_19 [0] : vector<8x8xf32> to vector<8xf32>
      %28 = vector.shape_cast %27 : vector<8xf32> to vector<1x8xf32>
      %29 = vector.broadcast %28 : vector<1x8xf32> to vector<8x8xf32>
      %30 = arith.subf %26, %29 : vector<8x8xf32>
      %31 = math.exp %30 : vector<8x8xf32>
      %cst_20 = arith.constant dense<0.000000e+00> : vector<8xf32>
      %32 = vector.multi_reduction <add>, %31, %cst_20 [0] : vector<8x8xf32> to vector<8xf32>
      %33 = vector.shape_cast %32 : vector<8xf32> to vector<1x8xf32>
      %34 = math.log %33 : vector<1x8xf32>
      %35 = arith.addf %28, %34 : vector<1x8xf32>
      %c0_21 = arith.constant 0 : index
      %36 = arith.index_cast %arg6 : i32 to index
      %c0_22 = arith.constant 0 : index
      %c0_23 = arith.constant 0 : index
      %37 = vector.load %arg1[%c0_21, %36, %c0_22, %c0_23] : memref<1x8x1x8xf32, #tpu.memory_space<vmem>>, vector<1x1x1x8xf32>
      %38 = vector.shape_cast %37 : vector<1x1x1x8xf32> to vector<1x8xf32>
      %39 = arith.addf %35, %38 : vector<1x8xf32>
      %c0_24 = arith.constant 0 : index
      %40 = arith.index_cast %arg6 : i32 to index
      %c0_25 = arith.constant 0 : index
      %c0_26 = arith.constant 0 : index
      %41 = vector.load %arg3[%c0_24, %40, %c0_25, %c0_26] : memref<1x8x1x8xf32, #tpu.memory_space<vmem>>, vector<1x1x1x8xf32>
      %42 = vector.shape_cast %41 : vector<1x1x1x8xf32> to vector<1x8xf32>
      %cst_27 = arith.constant 5.000000e-01 : f32
      %43 = vector.broadcast %cst_27 : f32 to vector<1x8xf32>
      %44 = arith.cmpf ogt, %42, %43 : vector<1x8xf32>
      %45 = arith.select %44, %39, %19 : vector<1x8xi1>, vector<1x8xf32>
      %c0_28 = arith.constant 0 : index
      %c0_29 = arith.constant 0 : index
      %46 = vector.load %arg5[%c0_28, %c0_29] : memref<1x8xf32, #tpu.memory_space<vmem>>, vector<1x8xf32>
      tpu.vector_store %arg5[%c0_28, %c0_29], %45 {strides = array<i32>} : memref<1x8xf32, #tpu.memory_space<vmem>>, vector<1x8xf32>,
    }
    %c7_i32_6 = arith.constant 7 : i32
    %c0_7 = arith.constant 0 : index
    %c0_8 = arith.constant 0 : index
    %4 = vector.load %arg5[%c0_7, %c0_8] : memref<1x8xf32, #tpu.memory_space<vmem>>, vector<1x8xf32>
    %cst = arith.constant dense<0xFF800000> : vector<1xf32>
    %5 = vector.multi_reduction <maximumf>, %4, %cst [1] : vector<1x8xf32> to vector<1xf32>
    %6 = vector.shape_cast %5 : vector<1xf32> to vector<1x1xf32>
    %7 = vector.broadcast %6 : vector<1x1xf32> to vector<1x8xf32>
    %8 = arith.subf %4, %7 : vector<1x8xf32>
    %9 = math.exp %8 : vector<1x8xf32>
    %cst_9 = arith.constant dense<0.000000e+00> : vector<1xf32>
    %10 = vector.multi_reduction <add>, %9, %cst_9 [1] : vector<1x8xf32> to vector<1xf32>
    %11 = vector.shape_cast %10 : vector<1xf32> to vector<1x1xf32>
    %12 = math.log %11 : vector<1x1xf32>
    %13 = arith.addf %6, %12 : vector<1x1xf32>
    %14 = vector.shape_cast %13 : vector<1x1xf32> to vector<1x1xf32>
    %15 = vector.broadcast %14 : vector<1x1xf32> to vector<1x128xf32>
    %c0_10 = arith.constant 0 : index
    %c0_11 = arith.constant 0 : index
    %c0_12 = arith.constant 0 : index
    %16 = vector.load %arg4[%c0_10, %c0_11, %c0_12] : memref<1x1x128xf32, #tpu.memory_space<vmem>>, vector<1x1x128xf32>
    %17 = vector.shape_cast %16 : vector<1x1x128xf32> to vector<1x128xf32>
    %18 = vector.shape_cast %15 : vector<1x128xf32> to vector<1x1x128xf32>
    tpu.vector_store %arg4[%c0_10, %c0_11, %c0_12], %18 {strides = array<i32>} : memref<1x1x128xf32, #tpu.memory_space<vmem>>, vector<1x1x128xf32>,
    return
  }
  func.func @transform_0(%arg0: i32) -> (i32, i32, i32, i32) {
    %c0_i32 = arith.constant 0 : i32
    %c0_i32_0 = arith.constant 0 : i32
    %c0_i32_1 = arith.constant 0 : i32
    %c0_i32_2 = arith.constant 0 : i32
    return %arg0, %c0_i32, %c0_i32_0, %c0_i32_1 : i32, i32, i32, i32
  }
  func.func @transform_1(%arg0: i32) -> (i32, i32, i32, i32) {
    %c0_i32 = arith.constant 0 : i32
    %c0_i32_0 = arith.constant 0 : i32
    %c0_i32_1 = arith.constant 0 : i32
    %c0_i32_2 = arith.constant 0 : i32
    return %arg0, %c0_i32, %c0_i32_0, %c0_i32_1 : i32, i32, i32, i32
  }
  func.func @transform_2(%arg0: i32) -> (i32, i32, i32, i32) {
    %c0_i32 = arith.constant 0 : i32
    %c0_i32_0 = arith.constant 0 : i32
    %c0_i32_1 = arith.constant 0 : i32
    %c0_i32_2 = arith.constant 0 : i32
    return %arg0, %c0_i32, %c0_i32_0, %c0_i32_1 : i32, i32, i32, i32
  }
  func.func @transform_3(%arg0: i32) -> (i32, i32, i32) {
    %c0_i32 = arith.constant 0 : i32
    %c0_i32_0 = arith.constant 0 : i32
    %c0_i32_1 = arith.constant 0 : i32
    return %arg0, %c0_i32, %c0_i32_0 : i32, i32, i32
  }
}

</mosaic_0001>

<llo_original>
// kernel: crf_model_forward.3
$region0: #{crf_model_forward.3}
  #allocation0 [shape = 'u32[]', space=smem, size = 0x4, offset = 0x4, fixed_abs, tag = 'smem constant byte address 0x4 - core index']
  #allocation1 [shape = 'u32[144,128]{1,0:T(1,128)}', space=vmem, size = 0x12000, scoped, tag = 'internal scratch']
  #allocation2 [shape = 'f32[16,128]{1,0:T(8,128)}', space=vmem, size = 0x2000, scoped, tag = 'scratch operand']
  %s0 = inlined_call_operand.vmem [shape: bf16[16,32], index: 0, kind: input, shape index: {}]
  %s1 = inlined_call_operand.vmem [shape: bf16[32,128], index: 1, kind: input, shape index: {}]
  %s2 = inlined_call_operand.vmem [shape: f32[1,128], index: 2, kind: input, shape index: {}]
  %s3 = inlined_call_operand.vmem [shape: f32[16,128], index: 3, kind: output, shape index: {}]
  %s4 = sld [smem:[#allocation0]]
  $region30: #{crf_model_forward.3} parent=0
    _
  %s6 = ssub.s32 1, %s4
  %s7 = scalar_select 0, %s6, %s4
  // Predicated region
  $region2: #{crf_model_forward.3} parent=0 // pred_check
    _
  $region3: #{crf_model_forward.3} parent=0 // pred_check_branch
    %9 = sbr.rel (0) target = $region5
  $region4: #{crf_model_forward.3} parent=0 // pred_region
    _
  $region5: #{crf_model_forward.3} parent=0 // pred_fallthru
    _
  // Predicated region
  $region6: #{crf_model_forward.3} parent=0 // pred_check
    _
  $region7: #{crf_model_forward.3} parent=0 // pred_check_branch
    %11 = sbr.rel (0) target = $region9
  $region8: #{crf_model_forward.3} parent=0 // pred_region
    _
  $region9: #{crf_model_forward.3} parent=0 // pred_fallthru
    _
  // Predicated region
  $region10: #{crf_model_forward.3} parent=0 // pred_check
    _
  $region11: #{crf_model_forward.3} parent=0 // pred_check_branch
    %13 = sbr.rel (0) target = $region13
  $region12: #{crf_model_forward.3} parent=0 // pred_region
    _
  $region13: #{crf_model_forward.3} parent=0 // pred_fallthru
    _
  %p15 = scmp.eq.s32.totalorder 0, 0
  // Predicated region
  $region14: #{crf_model_forward.3} parent=0 // pred_check
    %p16 = pneg %p15
  $region15: #{crf_model_forward.3} parent=0 // pred_check_branch
    %18 = sbr.rel (%p16) target = $region17
  $region16: #{crf_model_forward.3} parent=0 // pred_region
    %19 = vst [vmem:[#allocation2] sm:$0xff] 0.0
    %20 = vst [vmem:[#allocation2 + $0x8] sm:$0xff] 0.0
  $region17: #{crf_model_forward.3} parent=0 // pred_fallthru
    _
  %v21 = vld [vmem:[#allocation2] sm:$0xff]
  %v22 = vld [vmem:[#allocation2 + $0x8] sm:$0xff]
  %v23 = vld [vmem:[%s0] sm:$0xf]
  %v24 = vld [vmem:[%s0 + $0x4] sm:$0xf]
  %v25 = vld [vmem:[%s1] sm:$0xf]
  %v26 = vld [vmem:[%s1 + $0x4] sm:$0xf]
  %v27 = vld [vmem:[%s1 + $0x8] sm:$0xf]
  %v28 = vld [vmem:[%s1 + $0xc] sm:$0xf]
  %v31 = vunpack.c.l.b16 %v23
  %v32 = vunpack.c.l.b16 %v24
  %v33 = vpack.c.b16 %v32, %v31
  %v38 = vunpack.c.l.b16 %v25
  %v39 = vunpack.c.l.b16 %v26
  %v40 = vunpack.c.l.b16 %v27
  %v41 = vunpack.c.l.b16 %v28
  %v42 = vpack.c.b16 %v39, %v38
  %v43 = vpack.c.b16 %v41, %v40
  %vm46 = vcmask 261120
  %v48 = vsel %vm46, %v33, 0
  %50 = vmatprep.subr.bf16.mxu0 0
  %51 = vmatpush1.bf16.msra.mxu0 %v42
  %52 = vmatprep.subr.bf16.mxu0 0
  %53 = vmatpush1.bf16.msra.mxu0 %v43
  %54 = vmatprep.subr.bf16.mxu0 0
  %55 = vmatpush1.bf16.msra.mxu0 0
  %56 = vmatprep.subr.bf16.mxu0 0
  %57 = vmatpush1.bf16.msra.mxu0 0
  %58 = vmatprep.subr.bf16.mxu0 0
  %59 = vmatpush1.bf16.msra.mxu0 0
  %60 = vmatprep.subr.bf16.mxu0 0
  %61 = vmatpush1.bf16.msra.mxu0 0
  %62 = vmatprep.subr.bf16.mxu0 0
  %63 = vmatpush1.bf16.msra.mxu0 0
  %64 = vmatprep.subr.bf16.mxu0 0
  %65 = vmatpush1.bf16.msra.mxu0 0
  %66 = vmatprep.subr.bf16.mxu0 0
  %67 = vmatpush1.bf16.msra.mxu0 0
  %68 = vmatprep.subr.bf16.mxu0 0
  %69 = vmatpush1.bf16.msra.mxu0 0
  %70 = vmatprep.subr.bf16.mxu0 0
  %71 = vmatpush1.bf16.msra.mxu0 0
  %72 = vmatprep.subr.bf16.mxu0 0
  %73 = vmatpush1.bf16.msra.mxu0 0
  %74 = vmatprep.subr.bf16.mxu0 0
  %75 = vmatpush1.bf16.msra.mxu0 0
  %76 = vmatprep.subr.bf16.mxu0 0
  %77 = vmatpush1.bf16.msra.mxu0 0
  %78 = vmatprep.subr.bf16.mxu0 0
  %79 = vmatpush1.bf16.msra.mxu0 0
  %80 = vmatprep.subr.bf16.mxu0 0
  %81 = vmatpush1.bf16.msra.mxu0 0
  %82 = vmatprep.mubr.bf16.mxu0 0
  %83 = vmatmul.mubr.bf16.gmra.mrb[0].mxu0 %v48
  %v84 = vpop.f32.mrb[0].mxu0
  %v85 = vadd.f32 0.0, %v84
  %v86 = vpop.f32.mrb[0].mxu0
  %v87 = vpop.f32.mrb[0].mxu0
  %v88 = vadd.f32 0.0, %v87
  %v89 = vpop.f32.mrb[0].mxu0
  %90 = vdwg.mxu0
  %v91 = vadd.f32 %v21, %v85
  %v92 = vadd.f32 %v22, %v88
  %93 = vst [vmem:[#allocation2] sm:$0xff] %v91
  %94 = vst [vmem:[#allocation2 + $0x8] sm:$0xff] %v92
  // Predicated region
  $region18: #{crf_model_forward.3} parent=0 // pred_check
    %p95 = pneg %p15
  $region19: #{crf_model_forward.3} parent=0 // pred_check_branch
    %97 = sbr.rel (%p95) target = $region21
  $region20: #{crf_model_forward.3} parent=0 // pred_region
    %v98 = vld [vmem:[#allocation2] sm:$0xff]
    %v99 = vld [vmem:[#allocation2 + $0x8] sm:$0xff]
    %v100 = vld [vmem:[%s2] sm:$0x1]
    %v102 = vlaneseq
    %v103 = vshrl.u32 %v102, 7
    %v104 = vsub.s32 0, %v103
    %v105 = vrot.slane %v100, %v104
    %v107 = vadd.f32 %v98, %v105
    %v108 = vadd.f32 %v99, %v105
    %109 = vst [vmem:[%s3] sm:$0xff] %v107
    %110 = vst [vmem:[%s3 + $0x8] sm:$0xff] %v108
  $region21: #{crf_model_forward.3} parent=0 // pred_fallthru
    _
  // Predicated region
  $region22: #{crf_model_forward.3} parent=0 // pred_check
    _
  $region23: #{crf_model_forward.3} parent=0 // pred_check_branch
    %112 = sbr.rel (0) target = $region25
  $region24: #{crf_model_forward.3} parent=0 // pred_region
    _
  $region25: #{crf_model_forward.3} parent=0 // pred_fallthru
    _
  // Predicated region
  $region26: #{crf_model_forward.3} parent=0 // pred_check
    _
  $region27: #{crf_model_forward.3} parent=0 // pred_check_branch
    %114 = sbr.rel (0) target = $region29
  $region28: #{crf_model_forward.3} parent=0 // pred_region
    _
  $region29: #{crf_model_forward.3} parent=0 // pred_fallthru
    _

// kernel: crf_model_forward.4
$region0: #{crf_model_forward.4}
  #allocation0 [shape = 'u32[]', space=smem, size = 0x4, offset = 0x4, fixed_abs, tag = 'smem constant byte address 0x4 - core index']
  #allocation1 [shape = 'u32[144,128]{1,0:T(1,128)}', space=vmem, size = 0x12000, scoped, tag = 'internal scratch']
  %s0 = inlined_call_operand.vmem [shape: bf16[14,8,16], index: 0, kind: input, shape index: {}]
  %s1 = inlined_call_operand.vmem [shape: bf16[14,8,16], index: 1, kind: input, shape index: {}]
  %s2 = inlined_call_operand.vmem [shape: f32[14,8,8], index: 2, kind: output, shape index: {}]
  %s3 = sld [smem:[#allocation0]]
  $region18: #{crf_model_forward.4} parent=0
    _
  %s5 = ssub.s32 1, %s3
  %s6 = scalar_select 0, %s5, %s3
  // Predicated region
  $region2: #{crf_model_forward.4} parent=0 // pred_check
    _
  $region3: #{crf_model_forward.4} parent=0 // pred_check_branch
    %8 = sbr.rel (0) target = $region5
  $region4: #{crf_model_forward.4} parent=0 // pred_region
    _
  $region5: #{crf_model_forward.4} parent=0 // pred_fallthru
    _
  // Predicated region
  $region6: #{crf_model_forward.4} parent=0 // pred_check
    _
  $region7: #{crf_model_forward.4} parent=0 // pred_check_branch
    %10 = sbr.rel (0) target = $region9
  $region8: #{crf_model_forward.4} parent=0 // pred_region
    _
  $region9: #{crf_model_forward.4} parent=0 // pred_fallthru
    _
  %v12 = vld [vmem:[%s0] sm:$0xf]
  %v13 = vld [vmem:[%s0 + $0x4] sm:$0xf]
  %v14 = vld [vmem:[%s0 + $0x8] sm:$0xf]
  %v15 = vld [vmem:[%s0 + $0xc] sm:$0xf]
  %v16 = vld [vmem:[%s0 + $0x10] sm:$0xf]
  %v17 = vld [vmem:[%s0 + $0x14] sm:$0xf]
  %v18 = vld [vmem:[%s0 + $0x18] sm:$0xf]
  %v19 = vld [vmem:[%s0 + $0x1c] sm:$0xf]
  %v20 = vld [vmem:[%s0 + $0x20] sm:$0xf]
  %v21 = vld [vmem:[%s0 + $0x24] sm:$0xf]
  %v22 = vld [vmem:[%s0 + $0x28] sm:$0xf]
  %v23 = vld [vmem:[%s0 + $0x2c] sm:$0xf]
  %v24 = vld [vmem:[%s0 + $0x30] sm:$0xf]
  %v25 = vld [vmem:[%s0 + $0x34] sm:$0xf]
  %v26 = vld [vmem:[%s1] sm:$0xf]
  %v27 = vld [vmem:[%s1 + $0x4] sm:$0xf]
  %v28 = vld [vmem:[%s1 + $0x8] sm:$0xf]
  %v29 = vld [vmem:[%s1 + $0xc] sm:$0xf]
  %v30 = vld [vmem:[%s1 + $0x10] sm:$0xf]
  %v31 = vld [vmem:[%s1 + $0x14] sm:$0xf]
  %v32 = vld [vmem:[%s1 + $0x18] sm:$0xf]
  %v33 = vld [vmem:[%s1 + $0x1c] sm:$0xf]
  %v34 = vld [vmem:[%s1 + $0x20] sm:$0xf]
  %v35 = vld [vmem:[%s1 + $0x24] sm:$0xf]
  %v36 = vld [vmem:[%s1 + $0x28] sm:$0xf]
  %v37 = vld [vmem:[%s1 + $0x2c] sm:$0xf]
  %v38 = vld [vmem:[%s1 + $0x30] sm:$0xf]
  %v39 = vld [vmem:[%s1 + $0x34] sm:$0xf]
  %vm40 = vcmask 130048
  %v42 = vsel %vm40, %v12, 0
  %v45 = vsel %vm40, %v26, 0
  %47 = vmatprep.subr.bf16.mxu0 0
  %48 = vmatpush1.bf16.xpose.msra.mxu0 %v45
  %49 = vmatprep.subr.bf16.mxu0 0
  %50 = vmatpush1.bf16.xpose.msra.mxu0 0
  %51 = vmatprep.subr.bf16.mxu0 0
  %52 = vmatpush1.bf16.xpose.msra.mxu0 0
  %53 = vmatprep.subr.bf16.mxu0 0
  %54 = vmatpush1.bf16.xpose.msra.mxu0 0
  %55 = vmatprep.subr.bf16.mxu0 0
  %56 = vmatpush1.bf16.xpose.msra.mxu0 0
  %57 = vmatprep.subr.bf16.mxu0 0
  %58 = vmatpush1.bf16.xpose.msra.mxu0 0
  %59 = vmatprep.subr.bf16.mxu0 0
  %60 = vmatpush1.bf16.xpose.msra.mxu0 0
  %61 = vmatprep.subr.bf16.mxu0 0
  %62 = vmatpush1.bf16.xpose.msra.mxu0 0
  %63 = vmatprep.subr.bf16.mxu0 0
  %64 = vmatpush1.bf16.xpose.msra.mxu0 0
  %65 = vmatprep.subr.bf16.mxu0 0
  %66 = vmatpush1.bf16.xpose.msra.mxu0 0
  %67 = vmatprep.subr.bf16.mxu0 0
  %68 = vmatpush1.bf16.xpose.msra.mxu0 0
  %69 = vmatprep.subr.bf16.mxu0 0
  %70 = vmatpush1.bf16.xpose.msra.mxu0 0
  %71 = vmatprep.subr.bf16.mxu0 0
  %72 = vmatpush1.bf16.xpose.msra.mxu0 0
  %73 = vmatprep.subr.bf16.mxu0 0
  %74 = vmatpush1.bf16.xpose.msra.mxu0 0
  %75 = vmatprep.subr.bf16.mxu0 0
  %76 = vmatpush1.bf16.xpose.msra.mxu0 0
  %77 = vmatprep.subr.bf16.mxu0 0
  %78 = vmatpush1.bf16.xpose.msra.mxu0 0
  %79 = vmatprep.mubr.bf16.mxu0 0
  %80 = vmatmul.mubr.bf16.gmra.mrb[0].mxu0 %v42
  %v81 = vpop.f32.mrb[0].mxu0
  %v82 = vadd.f32 0.0, %v81
  %v83 = vpop.f32.mrb[0].mxu0
  %v84 = vpop.f32.mrb[0].mxu0
  %v85 = vpop.f32.mrb[0].mxu0
  %86 = vdwg.mxu0
  %v88 = vsel %vm40, %v13, 0
  %v91 = vsel %vm40, %v27, 0
  %93 = vmatprep.subr.bf16.mxu0 0
  %94 = vmatpush1.bf16.xpose.msra.mxu0 %v91
  %95 = vmatprep.subr.bf16.mxu0 0
  %96 = vmatpush1.bf16.xpose.msra.mxu0 0
  %97 = vmatprep.subr.bf16.mxu0 0
  %98 = vmatpush1.bf16.xpose.msra.mxu0 0
  %99 = vmatprep.subr.bf16.mxu0 0
  %100 = vmatpush1.bf16.xpose.msra.mxu0 0
  %101 = vmatprep.subr.bf16.mxu0 0
  %102 = vmatpush1.bf16.xpose.msra.mxu0 0
  %103 = vmatprep.subr.bf16.mxu0 0
  %104 = vmatpush1.bf16.xpose.msra.mxu0 0
  %105 = vmatprep.subr.bf16.mxu0 0
  %106 = vmatpush1.bf16.xpose.msra.mxu0 0
  %107 = vmatprep.subr.bf16.mxu0 0
  %108 = vmatpush1.bf16.xpose.msra.mxu0 0
  %109 = vmatprep.subr.bf16.mxu0 0
  %110 = vmatpush1.bf16.xpose.msra.mxu0 0
  %111 = vmatprep.subr.bf16.mxu0 0
  %112 = vmatpush1.bf16.xpose.msra.mxu0 0
  %113 = vmatprep.subr.bf16.mxu0 0
  %114 = vmatpush1.bf16.xpose.msra.mxu0 0
  %115 = vmatprep.subr.bf16.mxu0 0
  %116 = vmatpush1.bf16.xpose.msra.mxu0 0
  %117 = vmatprep.subr.bf16.mxu0 0
  %118 = vmatpush1.bf16.xpose.msra.mxu0 0
  %119 = vmatprep.subr.bf16.mxu0 0
  %120 = vmatpush1.bf16.xpose.msra.mxu0 0
  %121 = vmatprep.subr.bf16.mxu0 0
  %122 = vmatpush1.bf16.xpose.msra.mxu0 0
  %123 = vmatprep.subr.bf16.mxu0 0
  %124 = vmatpush1.bf16.xpose.msra.mxu0 0
  %125 = vmatprep.mubr.bf16.mxu0 0
  %126 = vmatmul.mubr.bf16.gmra.mrb[0].mxu0 %v88
  %v127 = vpop.f32.mrb[0].mxu0
  %v128 = vadd.f32 0.0, %v127
  %v129 = vpop.f32.mrb[0].mxu0
  %v130 = vpop.f32.mrb[0].mxu0
  %v131 = vpop.f32.mrb[0].mxu0
  %132 = vdwg.mxu0
  %v134 = vsel %vm40, %v14, 0
  %v137 = vsel %vm40, %v28, 0
  %139 = vmatprep.subr.bf16.mxu0 0
  %140 = vmatpush1.bf16.xpose.msra.mxu0 %v137
  %141 = vmatprep.subr.bf16.mxu0 0
  %142 = vmatpush1.bf16.xpose.msra.mxu0 0
  %143 = vmatprep.subr.bf16.mxu0 0
  %144 = vmatpush1.bf16.xpose.msra.mxu0 0
  %145 = vmatprep.subr.bf16.mxu0 0
  %146 = vmatpush1.bf16.xpose.msra.mxu0 0
  %147 = vmatprep.subr.bf16.mxu0 0
  %148 = vmatpush1.bf16.xpose.msra.mxu0 0
  %149 = vmatprep.subr.bf16.mxu0 0
  %150 = vmatpush1.bf16.xpose.msra.mxu0 0
  %151 = vmatprep.subr.bf16.mxu0 0
  %152 = vmatpush1.bf16.xpose.msra.mxu0 0
  %153 = vmatprep.subr.bf16.mxu0 0
  %154 = vmatpush1.bf16.xpose.msra.mxu0 0
  %155 = vmatprep.subr.bf16.mxu0 0
  %156 = vmatpush1.bf16.xpose.msra.mxu0 0
  %157 = vmatprep.subr.bf16.mxu0 0
  %158 = vmatpush1.bf16.xpose.msra.mxu0 0
  %159 = vmatprep.subr.bf16.mxu0 0
  %160 = vmatpush1.bf16.xpose.msra.mxu0 0
  %161 = vmatprep.subr.bf16.mxu0 0
  %162 = vmatpush1.bf16.xpose.msra.mxu0 0
  %163 = vmatprep.subr.bf16.mxu0 0
  %164 = vmatpush1.bf16.xpose.msra.mxu0 0
  %165 = vmatprep.subr.bf16.mxu0 0
  %166 = vmatpush1.bf16.xpose.msra.mxu0 0
  %167 = vmatprep.subr.bf16.mxu0 0
  %168 = vmatpush1.bf16.xpose.msra.mxu0 0
  %169 = vmatprep.subr.bf16.mxu0 0
  %170 = vmatpush1.bf16.xpose.msra.mxu0 0
  %171 = vmatprep.mubr.bf16.mxu0 0
  %172 = vmatmul.mubr.bf16.gmra.mrb[0].mxu0 %v134
  %v173 = vpop.f32.mrb[0].mxu0
  %v174 = vadd.f32 0.0, %v173
  %v175 = vpop.f32.mrb[0].mxu0
  %v176 = vpop.f32.mrb[0].mxu0
  %v177 = vpop.f32.mrb[0].mxu0
  %178 = vdwg.mxu0
  %v180 = vsel %vm40, %v15, 0
  %v183 = vsel %vm40, %v29, 0
  %185 = vmatprep.subr.bf16.mxu0 0
  %186 = vmatpush1.bf16.xpose.msra.mxu0 %v183
  %187 = vmatprep.subr.bf16.mxu0 0
  %188 = vmatpush1.bf16.xpose.msra.mxu0 0
  %189 = vmatprep.subr.bf16.mxu0 0
  %190 = vmatpush1.bf16.xpose.msra.mxu0 0
  %191 = vmatprep.subr.bf16.mxu0 0
  %192 = vmatpush1.bf16.xpose.msra.mxu0 0
  %193 = vmatprep.subr.bf16.mxu0 0
  %194 = vmatpush1.bf16.xpose.msra.mxu0 0
  %195 = vmatprep.subr.bf16.mxu0 0
  %196 = vmatpush1.bf16.xpose.msra.mxu0 0
  %197 = vmatprep.subr.bf16.mxu0 0
  %198 = vmatpush1.bf16.xpose.msra.mxu0 0
  %199 = vmatprep.subr.bf16.mxu0 0
  %200 = vmatpush1.bf16.xpose.msra.mxu0 0
  %201 = vmatprep.subr.bf16.mxu0 0
  %202 = vmatpush1.bf16.xpose.msra.mxu0 0
  %203 = vmatprep.subr.bf16.mxu0 0
  %204 = vmatpush1.bf16.xpose.msra.mxu0 0
  %205 = vmatprep.subr.bf16.mxu0 0
  %206 = vmatpush1.bf16.xpose.msra.mxu0 0
  %207 = vmatprep.subr.bf16.mxu0 0
  %208 = vmatpush1.bf16.xpose.msra.mxu0 0
  %209 = vmatprep.subr.bf16.mxu0 0
  %210 = vmatpush1.bf16.xpose.msra.mxu0 0
  %211 = vmatprep.subr.bf16.mxu0 0
  %212 = vmatpush1.bf16.xpose.msra.mxu0 0
  %213 = vmatprep.subr.bf16.mxu0 0
  %214 = vmatpush1.bf16.xpose.msra.mxu0 0
  %215 = vmatprep.subr.bf16.mxu0 0
  %216 = vmatpush1.bf16.xpose.msra.mxu0 0
  %217 = vmatprep.mubr.bf16.mxu0 0
  %218 = vmatmul.mubr.bf16.gmra.mrb[0].mxu0 %v180
  %v219 = vpop.f32.mrb[0].mxu0
  %v220 = vadd.f32 0.0, %v219
  %v221 = vpop.f32.mrb[0].mxu0
  %v222 = vpop.f32.mrb[0].mxu0
  %v223 = vpop.f32.mrb[0].mxu0
  %224 = vdwg.mxu0
  %v226 = vsel %vm40, %v16, 0
  %v229 = vsel %vm40, %v30, 0
  %231 = vmatprep.subr.bf16.mxu0 0
  %232 = vmatpush1.bf16.xpose.msra.mxu0 %v229
  %233 = vmatprep.subr.bf16.mxu0 0
  %234 = vmatpush1.bf16.xpose.msra.mxu0 0
  %235 = vmatprep.subr.bf16.mxu0 0
  %236 = vmatpush1.bf16.xpose.msra.mxu0 0
  %237 = vmatprep.subr.bf16.mxu0 0
  %238 = vmatpush1.bf16.xpose.msra.mxu0 0
  %239 = vmatprep.subr.bf16.mxu0 0
  %240 = vmatpush1.bf16.xpose.msra.mxu0 0
  %241 = vmatprep.subr.bf16.mxu0 0
  %242 = vmatpush1.bf16.xpose.msra.mxu0 0
  %243 = vmatprep.subr.bf16.mxu0 0
  %244 = vmatpush1.bf16.xpose.msra.mxu0 0
  %245 = vmatprep.subr.bf16.mxu0 0
  %246 = vmatpush1.bf16.xpose.msra.mxu0 0
  %247 = vmatprep.subr.bf16.mxu0 0
  %248 = vmatpush1.bf16.xpose.msra.mxu0 0
  %249 = vmatprep.subr.bf16.mxu0 0
  %250 = vmatpush1.bf16.xpose.msra.mxu0 0
  %251 = vmatprep.subr.bf16.mxu0 0
  %252 = vmatpush1.bf16.xpose.msra.mxu0 0
  %253 = vmatprep.subr.bf16.mxu0 0
  %254 = vmatpush1.bf16.xpose.msra.mxu0 0
  %255 = vmatprep.subr.bf16.mxu0 0
  %256 = vmatpush1.bf16.xpose.msra.mxu0 0
  %257 = vmatprep.subr.bf16.mxu0 0
  %258 = vmatpush1.bf16.xpose.msra.mxu0 0
  %259 = vmatprep.subr.bf16.mxu0 0
  %260 = vmatpush1.bf16.xpose.msra.mxu0 0
  %261 = vmatprep.subr.bf16.mxu0 0
  %262 = vmatpush1.bf16.xpose.msra.mxu0 0
  %263 = vmatprep.mubr.bf16.mxu0 0
  %264 = vmatmul.mubr.bf16.gmra.mrb[0].mxu0 %v226
  %v265 = vpop.f32.mrb[0].mxu0
  %v266 = vadd.f32 0.0, %v265
  %v267 = vpop.f32.mrb[0].mxu0
  %v268 = vpop.f32.mrb[0].mxu0
  %v269 = vpop.f32.mrb[0].mxu0
  %270 = vdwg.mxu0
  %v272 = vsel %vm40, %v17, 0
  %v275 = vsel %vm40, %v31, 0
  %277 = vmatprep.subr.bf16.mxu0 0
  %278 = vmatpush1.bf16.xpose.msra.mxu0 %v275
  %279 = vmatprep.subr.bf16.mxu0 0
  %280 = vmatpush1.bf16.xpose.msra.mxu0 0
  %281 = vmatprep.subr.bf16.mxu0 0
  %282 = vmatpush1.bf16.xpose.msra.mxu0 0
  %283 = vmatprep.subr.bf16.mxu0 0
  %284 = vmatpush1.bf16.xpose.msra.mxu0 0
  %285 = vmatprep.subr.bf16.mxu0 0
  %286 = vmatpush1.bf16.xpose.msra.mxu0 0
  %287 = vmatprep.subr.bf16.mxu0 0
  %288 = vmatpush1.bf16.xpose.msra.mxu0 0
  %289 = vmatprep.subr.bf16.mxu0 0
  %290 = vmatpush1.bf16.xpose.msra.mxu0 0
  %291 = vmatprep.subr.bf16.mxu0 0
  %292 = vmatpush1.bf16.xpose.msra.mxu0 0
  %293 = vmatprep.subr.bf16.mxu0 0
  %294 = vmatpush1.bf16.xpose.msra.mxu0 0
  %295 = vmatprep.subr.bf16.mxu0 0
  %296 = vmatpush1.bf16.xpose.msra.mxu0 0
  %297 = vmatprep.subr.bf16.mxu0 0
  %298 = vmatpush1.bf16.xpose.msra.mxu0 0
  %299 = vmatprep.subr.bf16.mxu0 0
  %300 = vmatpush1.bf16.xpose.msra.mxu0 0
  %301 = vmatprep.subr.bf16.mxu0 0
  %302 = vmatpush1.bf16.xpose.msra.mxu0 0
  %303 = vmatprep.subr.bf16.mxu0 0
  %304 = vmatpush1.bf16.xpose.msra.mxu0 0
  %305 = vmatprep.subr.bf16.mxu0 0
  %306 = vmatpush1.bf16.xpose.msra.mxu0 0
  %307 = vmatprep.subr.bf16.mxu0 0
  %308 = vmatpush1.bf16.xpose.msra.mxu0 0
  %309 = vmatprep.mubr.bf16.mxu0 0
  %310 = vmatmul.mubr.bf16.gmra.mrb[0].mxu0 %v272
  %v311 = vpop.f32.mrb[0].mxu0
  %v312 = vadd.f32 0.0, %v311
  %v313 = vpop.f32.mrb[0].mxu0
  %v314 = vpop.f32.mrb[0].mxu0
  %v315 = vpop.f32.mrb[0].mxu0
  %316 = vdwg.mxu0
  %v318 = vsel %vm40, %v18, 0
  %v321 = vsel %vm40, %v32, 0
  %323 = vmatprep.subr.bf16.mxu0 0
  %324 = vmatpush1.bf16.xpose.msra.mxu0 %v321
  %325 = vmatprep.subr.bf16.mxu0 0
  %326 = vmatpush1.bf16.xpose.msra.mxu0 0
  %327 = vmatprep.subr.bf16.mxu0 0
  %328 = vmatpush1.bf16.xpose.msra.mxu0 0
  %329 = vmatprep.subr.bf16.mxu0 0
  %330 = vmatpush1.bf16.xpose.msra.mxu0 0
  %331 = vmatprep.subr.bf16.mxu0 0
  %332 = vmatpush1.bf16.xpose.msra.mxu0 0
  %333 = vmatprep.subr.bf16.mxu0 0
  %334 = vmatpush1.bf16.xpose.msra.mxu0 0
  %335 = vmatprep.subr.bf16.mxu0 0
  %336 = vmatpush1.bf16.xpose.msra.mxu0 0
  %337 = vmatprep.subr.bf16.mxu0 0
  %338 = vmatpush1.bf16.xpose.msra.mxu0 0
  %339 = vmatprep.subr.bf16.mxu0 0
  %340 = vmatpush1.bf16.xpose.msra.mxu0 0
  %341 = vmatprep.subr.bf16.mxu0 0
  %342 = vmatpush1.bf16.xpose.msra.mxu0 0
  %343 = vmatprep.subr.bf16.mxu0 0
  %344 = vmatpush1.bf16.xpose.msra.mxu0 0
  %345 = vmatprep.subr.bf16.mxu0 0
  %346 = vmatpush1.bf16.xpose.msra.mxu0 0
  %347 = vmatprep.subr.bf16.mxu0 0
  %348 = vmatpush1.bf16.xpose.msra.mxu0 0
  %349 = vmatprep.subr.bf16.mxu0 0
  %350 = vmatpush1.bf16.xpose.msra.mxu0 0
  %351 = vmatprep.subr.bf16.mxu0 0
  %352 = vmatpush1.bf16.xpose.msra.mxu0 0
  %353 = vmatprep.subr.bf16.mxu0 0
  %354 = vmatpush1.bf16.xpose.msra.mxu0 0
  %355 = vmatprep.mubr.bf16.mxu0 0
  %356 = vmatmul.mubr.bf16.gmra.mrb[0].mxu0 %v318
  %v357 = vpop.f32.mrb[0].mxu0
  %v358 = vadd.f32 0.0, %v357
  %v359 = vpop.f32.mrb[0].mxu0
  %v360 = vpop.f32.mrb[0].mxu0
  %v361 = vpop.f32.mrb[0].mxu0
  %362 = vdwg.mxu0
  %v364 = vsel %vm40, %v19, 0
  %v367 = vsel %vm40, %v33, 0
  %369 = vmatprep.subr.bf16.mxu0 0
  %370 = vmatpush1.bf16.xpose.msra.mxu0 %v367
  %371 = vmatprep.subr.bf16.mxu0 0
  %372 = vmatpush1.bf16.xpose.msra.mxu0 0
  %373 = vmatprep.subr.bf16.mxu0 0
  %374 = vmatpush1.bf16.xpose.msra.mxu0 0
  %375 = vmatprep.subr.bf16.mxu0 0
  %376 = vmatpush1.bf16.xpose.msra.mxu0 0
  %377 = vmatprep.subr.bf16.mxu0 0
  %378 = vmatpush1.bf16.xpose.msra.mxu0 0
  %379 = vmatprep.subr.bf16.mxu0 0
  %380 = vmatpush1.bf16.xpose.msra.mxu0 0
  %381 = vmatprep.subr.bf16.mxu0 0
  %382 = vmatpush1.bf16.xpose.msra.mxu0 0
  %383 = vmatprep.subr.bf16.mxu0 0
  %384 = vmatpush1.bf16.xpose.msra.mxu0 0
  %385 = vmatprep.subr.bf16.mxu0 0
  %386 = vmatpush1.bf16.xpose.msra.mxu0 0
  %387 = vmatprep.subr.bf16.mxu0 0
  %388 = vmatpush1.bf16.xpose.msra.mxu0 0
  %389 = vmatprep.subr.bf16.mxu0 0
  %390 = vmatpush1.bf16.xpose.msra.mxu0 0
  %391 = vmatprep.subr.bf16.mxu0 0
  %392 = vmatpush1.bf16.xpose.msra.mxu0 0
  %393 = vmatprep.subr.bf16.mxu0 0
  %394 = vmatpush1.bf16.xpose.msra.mxu0 0
  %395 = vmatprep.subr.bf16.mxu0 0
  %396 = vmatpush1.bf16.xpose.msra.mxu0 0
  %397 = vmatprep.subr.bf16.mxu0 0
  %398 = vmatpush1.bf16.xpose.msra.mxu0 0
  %399 = vmatprep.subr.bf16.mxu0 0
  %400 = vmatpush1.bf16.xpose.msra.mxu0 0
  %401 = vmatprep.mubr.bf16.mxu0 0
  %402 = vmatmul.mubr.bf16.gmra.mrb[0].mxu0 %v364
  %v403 = vpop.f32.mrb[0].mxu0
  %v404 = vadd.f32 0.0, %v403
  %v405 = vpop.f32.mrb[0].mxu0
  %v406 = vpop.f32.mrb[0].mxu0
  %v407 = vpop.f32.mrb[0].mxu0
  %408 = vdwg.mxu0
  %v410 = vsel %vm40, %v20, 0
  %v413 = vsel %vm40, %v34, 0
  %415 = vmatprep.subr.bf16.mxu0 0
  %416 = vmatpush1.bf16.xpose.msra.mxu0 %v413
  %417 = vmatprep.subr.bf16.mxu0 0
  %418 = vmatpush1.bf16.xpose.msra.mxu0 0
  %419 = vmatprep.subr.bf16.mxu0 0
  %420 = vmatpush1.bf16.xpose.msra.mxu0 0
  %421 = vmatprep.subr.bf16.mxu0 0
  %422 = vmatpush1.bf16.xpose.msra.mxu0 0
  %423 = vmatprep.subr.bf16.mxu0 0
  %424 = vmatpush1.bf16.xpose.msra.mxu0 0
  %425 = vmatprep.subr.bf16.mxu0 0
  %426 = vmatpush1.bf16.xpose.msra.mxu0 0
  %427 = vmatprep.subr.bf16.mxu0 0
  %428 = vmatpush1.bf16.xpose.msra.mxu0 0
  %429 = vmatprep.subr.bf16.mxu0 0
  %430 = vmatpush1.bf16.xpose.msra.mxu0 0
  %431 = vmatprep.subr.bf16.mxu0 0
  %432 = vmatpush1.bf16.xpose.msra.mxu0 0
  %433 = vmatprep.subr.bf16.mxu0 0
  %434 = vmatpush1.bf16.xpose.msra.mxu0 0
  %435 = vmatprep.subr.bf16.mxu0 0
  %436 = vmatpush1.bf16.xpose.msra.mxu0 0
  %437 = vmatprep.subr.bf16.mxu0 0
  %438 = vmatpush1.bf16.xpose.msra.mxu0 0
  %439 = vmatprep.subr.bf16.mxu0 0
  %440 = vmatpush1.bf16.xpose.msra.mxu0 0
  %441 = vmatprep.subr.bf16.mxu0 0
  %442 = vmatpush1.bf16.xpose.msra.mxu0 0
  %443 = vmatprep.subr.bf16.mxu0 0
  %444 = vmatpush1.bf16.xpose.msra.mxu0 0
  %445 = vmatprep.subr.bf16.mxu0 0
  %446 = vmatpush1.bf16.xpose.msra.mxu0 0
  %447 = vmatprep.mubr.bf16.mxu0 0
  %448 = vmatmul.mubr.bf16.gmra.mrb[0].mxu0 %v410
  %v449 = vpop.f32.mrb[0].mxu0
  %v450 = vadd.f32 0.0, %v449
  %v451 = vpop.f32.mrb[0].mxu0
  %v452 = vpop.f32.mrb[0].mxu0
  %v453 = vpop.f32.mrb[0].mxu0
  %454 = vdwg.mxu0
  %v456 = vsel %vm40, %v21, 0
  %v459 = vsel %vm40, %v35, 0
  %461 = vmatprep.subr.bf16.mxu0 0
  %462 = vmatpush1.bf16.xpose.msra.mxu0 %v459
  %463 = vmatprep.subr.bf16.mxu0 0
  %464 = vmatpush1.bf16.xpose.msra.mxu0 0
  %465 = vmatprep.subr.bf16.mxu0 0
  %466 = vmatpush1.bf16.xpose.msra.mxu0 0
  %467 = vmatprep.subr.bf16.mxu0 0
  %468 = vmatpush1.bf16.xpose.msra.mxu0 0
  %469 = vmatprep.subr.bf16.mxu0 0
  %470 = vmatpush1.bf16.xpose.msra.mxu0 0
  %471 = vmatprep.subr.bf16.mxu0 0
  %472 = vmatpush1.bf16.xpose.msra.mxu0 0
  %473 = vmatprep.subr.bf16.mxu0 0
  %474 = vmatpush1.bf16.xpose.msra.mxu0 0
  %475 = vmatprep.subr.bf16.mxu0 0
  %476 = vmatpush1.bf16.xpose.msra.mxu0 0
  %477 = vmatprep.subr.bf16.mxu0 0
  %478 = vmatpush1.bf16.xpose.msra.mxu0 0
  %479 = vmatprep.subr.bf16.mxu0 0
  %480 = vmatpush1.bf16.xpose.msra.mxu0 0
  %481 = vmatprep.subr.bf16.mxu0 0
  %482 = vmatpush1.bf16.xpose.msra.mxu0 0
  %483 = vmatprep.subr.bf16.mxu0 0
  %484 = vmatpush1.bf16.xpose.msra.mxu0 0
  %485 = vmatprep.subr.bf16.mxu0 0
  %486 = vmatpush1.bf16.xpose.msra.mxu0 0
  %487 = vmatprep.subr.bf16.mxu0 0
  %488 = vmatpush1.bf16.xpose.msra.mxu0 0
  %489 = vmatprep.subr.bf16.mxu0 0
  %490 = vmatpush1.bf16.xpose.msra.mxu0 0
  %491 = vmatprep.subr.bf16.mxu0 0
  %492 = vmatpush1.bf16.xpose.msra.mxu0 0
  %493 = vmatprep.mubr.bf16.mxu0 0
  %494 = vmatmul.mubr.bf16.gmra.mrb[0].mxu0 %v456
  %v495 = vpop.f32.mrb[0].mxu0
  %v496 = vadd.f32 0.0, %v495
  %v497 = vpop.f32.mrb[0].mxu0
  %v498 = vpop.f32.mrb[0].mxu0
  %v499 = vpop.f32.mrb[0].mxu0
  %500 = vdwg.mxu0
  %v502 = vsel %vm40, %v22, 0
  %v505 = vsel %vm40, %v36, 0
  %507 = vmatprep.subr.bf16.mxu0 0
  %508 = vmatpush1.bf16.xpose.msra.mxu0 %v505
  %509 = vmatprep.subr.bf16.mxu0 0
  %510 = vmatpush1.bf16.xpose.msra.mxu0 0
  %511 = vmatprep.subr.bf16.mxu0 0
  %512 = vmatpush1.bf16.xpose.msra.mxu0 0
  %513 = vmatprep.subr.bf16.mxu0 0
  %514 = vmatpush1.bf16.xpose.msra.mxu0 0
  %515 = vmatprep.subr.bf16.mxu0 0
  %516 = vmatpush1.bf16.xpose.msra.mxu0 0
  %517 = vmatprep.subr.bf16.mxu0 0
  %518 = vmatpush1.bf16.xpose.msra.mxu0 0
  %519 = vmatprep.subr.bf16.mxu0 0
  %520 = vmatpush1.bf16.xpose.msra.mxu0 0
  %521 = vmatprep.subr.bf16.mxu0 0
  %522 = vmatpush1.bf16.xpose.msra.mxu0 0
  %523 = vmatprep.subr.bf16.mxu0 0
  %524 = vmatpush1.bf16.xpose.msra.mxu0 0
  %525 = vmatprep.subr.bf16.mxu0 0
  %526 = vmatpush1.bf16.xpose.msra.mxu0 0
  %527 = vmatprep.subr.bf16.mxu0 0
  %528 = vmatpush1.bf16.xpose.msra.mxu0 0
  %529 = vmatprep.subr.bf16.mxu0 0
  %530 = vmatpush1.bf16.xpose.msra.mxu0 0
  %531 = vmatprep.subr.bf16.mxu0 0
  %532 = vmatpush1.bf16.xpose.msra.mxu0 0
  %533 = vmatprep.subr.bf16.mxu0 0
  %534 = vmatpush1.bf16.xpose.msra.mxu0 0
  %535 = vmatprep.subr.bf16.mxu0 0
  %536 = vmatpush1.bf16.xpose.msra.mxu0 0
  %537 = vmatprep.subr.bf16.mxu0 0
  %538 = vmatpush1.bf16.xpose.msra.mxu0 0
  %539 = vmatprep.mubr.bf16.mxu0 0
  %540 = vmatmul.mubr.bf16.gmra.mrb[0].mxu0 %v502
  %v541 = vpop.f32.mrb[0].mxu0
  %v542 = vadd.f32 0.0, %v541
  %v543 = vpop.f32.mrb[0].mxu0
  %v544 = vpop.f32.mrb[0].mxu0
  %v545 = vpop.f32.mrb[0].mxu0
  %546 = vdwg.mxu0
  %v548 = vsel %vm40, %v23, 0
  %v551 = vsel %vm40, %v37, 0
  %553 = vmatprep.subr.bf16.mxu0 0
  %554 = vmatpush1.bf16.xpose.msra.mxu0 %v551
  %555 = vmatprep.subr.bf16.mxu0 0
  %556 = vmatpush1.bf16.xpose.msra.mxu0 0
  %557 = vmatprep.subr.bf16.mxu0 0
  %558 = vmatpush1.bf16.xpose.msra.mxu0 0
  %559 = vmatprep.subr.bf16.mxu0 0
  %560 = vmatpush1.bf16.xpose.msra.mxu0 0
  %561 = vmatprep.subr.bf16.mxu0 0
  %562 = vmatpush1.bf16.xpose.msra.mxu0 0
  %563 = vmatprep.subr.bf16.mxu0 0
  %564 = vmatpush1.bf16.xpose.msra.mxu0 0
  %565 = vmatprep.subr.bf16.mxu0 0
  %566 = vmatpush1.bf16.xpose.msra.mxu0 0
  %567 = vmatprep.subr.bf16.mxu0 0
  %568 = vmatpush1.bf16.xpose.msra.mxu0 0
  %569 = vmatprep.subr.bf16.mxu0 0
  %570 = vmatpush1.bf16.xpose.msra.mxu0 0
  %571 = vmatprep.subr.bf16.mxu0 0
  %572 = vmatpush1.bf16.xpose.msra.mxu0 0
  %573 = vmatprep.subr.bf16.mxu0 0
  %574 = vmatpush1.bf16.xpose.msra.mxu0 0
  %575 = vmatprep.subr.bf16.mxu0 0
  %576 = vmatpush1.bf16.xpose.msra.mxu0 0
  %577 = vmatprep.subr.bf16.mxu0 0
  %578 = vmatpush1.bf16.xpose.msra.mxu0 0
  %579 = vmatprep.subr.bf16.mxu0 0
  %580 = vmatpush1.bf16.xpose.msra.mxu0 0
  %581 = vmatprep.subr.bf16.mxu0 0
  %582 = vmatpush1.bf16.xpose.msra.mxu0 0
  %583 = vmatprep.subr.bf16.mxu0 0
  %584 = vmatpush1.bf16.xpose.msra.mxu0 0
  %585 = vmatprep.mubr.bf16.mxu0 0
  %586 = vmatmul.mubr.bf16.gmra.mrb[0].mxu0 %v548
  %v587 = vpop.f32.mrb[0].mxu0
  %v588 = vadd.f32 0.0, %v587
  %v589 = vpop.f32.mrb[0].mxu0
  %v590 = vpop.f32.mrb[0].mxu0
  %v591 = vpop.f32.mrb[0].mxu0
  %592 = vdwg.mxu0
  %v594 = vsel %vm40, %v24, 0
  %v597 = vsel %vm40, %v38, 0
  %599 = vmatprep.subr.bf16.mxu0 0
  %600 = vmatpush1.bf16.xpose.msra.mxu0 %v597
  %601 = vmatprep.subr.bf16.mxu0 0
  %602 = vmatpush1.bf16.xpose.msra.mxu0 0
  %603 = vmatprep.subr.bf16.mxu0 0
  %604 = vmatpush1.bf16.xpose.msra.mxu0 0
  %605 = vmatprep.subr.bf16.mxu0 0
  %606 = vmatpush1.bf16.xpose.msra.mxu0 0
  %607 = vmatprep.subr.bf16.mxu0 0
  %608 = vmatpush1.bf16.xpose.msra.mxu0 0
  %609 = vmatprep.subr.bf16.mxu0 0
  %610 = vmatpush1.bf16.xpose.msra.mxu0 0
  %611 = vmatprep.subr.bf16.mxu0 0
  %612 = vmatpush1.bf16.xpose.msra.mxu0 0
  %613 = vmatprep.subr.bf16.mxu0 0
  %614 = vmatpush1.bf16.xpose.msra.mxu0 0
  %615 = vmatprep.subr.bf16.mxu0 0
  %616 = vmatpush1.bf16.xpose.msra.mxu0 0
  %617 = vmatprep.subr.bf16.mxu0 0
  %618 = vmatpush1.bf16.xpose.msra.mxu0 0
  %619 = vmatprep.subr.bf16.mxu0 0
  %620 = vmatpush1.bf16.xpose.msra.mxu0 0
  %621 = vmatprep.subr.bf16.mxu0 0
  %622 = vmatpush1.bf16.xpose.msra.mxu0 0
  %623 = vmatprep.subr.bf16.mxu0 0
  %624 = vmatpush1.bf16.xpose.msra.mxu0 0
  %625 = vmatprep.subr.bf16.mxu0 0
  %626 = vmatpush1.bf16.xpose.msra.mxu0 0
  %627 = vmatprep.subr.bf16.mxu0 0
  %628 = vmatpush1.bf16.xpose.msra.mxu0 0
  %629 = vmatprep.subr.bf16.mxu0 0
  %630 = vmatpush1.bf16.xpose.msra.mxu0 0
  %631 = vmatprep.mubr.bf16.mxu0 0
  %632 = vmatmul.mubr.bf16.gmra.mrb[0].mxu0 %v594
  %v633 = vpop.f32.mrb[0].mxu0
  %v634 = vadd.f32 0.0, %v633
  %v635 = vpop.f32.mrb[0].mxu0
  %v636 = vpop.f32.mrb[0].mxu0
  %v637 = vpop.f32.mrb[0].mxu0
  %638 = vdwg.mxu0
  %v640 = vsel %vm40, %v25, 0
  %v643 = vsel %vm40, %v39, 0
  %645 = vmatprep.subr.bf16.mxu0 0
  %646 = vmatpush1.bf16.xpose.msra.mxu0 %v643
  %647 = vmatprep.subr.bf16.mxu0 0
  %648 = vmatpush1.bf16.xpose.msra.mxu0 0
  %649 = vmatprep.subr.bf16.mxu0 0
  %650 = vmatpush1.bf16.xpose.msra.mxu0 0
  %651 = vmatprep.subr.bf16.mxu0 0
  %652 = vmatpush1.bf16.xpose.msra.mxu0 0
  %653 = vmatprep.subr.bf16.mxu0 0
  %654 = vmatpush1.bf16.xpose.msra.mxu0 0
  %655 = vmatprep.subr.bf16.mxu0 0
  %656 = vmatpush1.bf16.xpose.msra.mxu0 0
  %657 = vmatprep.subr.bf16.mxu0 0
  %658 = vmatpush1.bf16.xpose.msra.mxu0 0
  %659 = vmatprep.subr.bf16.mxu0 0
  %660 = vmatpush1.bf16.xpose.msra.mxu0 0
  %661 = vmatprep.subr.bf16.mxu0 0
  %662 = vmatpush1.bf16.xpose.msra.mxu0 0
  %663 = vmatprep.subr.bf16.mxu0 0
  %664 = vmatpush1.bf16.xpose.msra.mxu0 0
  %665 = vmatprep.subr.bf16.mxu0 0
  %666 = vmatpush1.bf16.xpose.msra.mxu0 0
  %667 = vmatprep.subr.bf16.mxu0 0
  %668 = vmatpush1.bf16.xpose.msra.mxu0 0
  %669 = vmatprep.subr.bf16.mxu0 0
  %670 = vmatpush1.bf16.xpose.msra.mxu0 0
  %671 = vmatprep.subr.bf16.mxu0 0
  %672 = vmatpush1.bf16.xpose.msra.mxu0 0
  %673 = vmatprep.subr.bf16.mxu0 0
  %674 = vmatpush1.bf16.xpose.msra.mxu0 0
  %675 = vmatprep.subr.bf16.mxu0 0
  %676 = vmatpush1.bf16.xpose.msra.mxu0 0
  %677 = vmatprep.mubr.bf16.mxu0 0
  %678 = vmatmul.mubr.bf16.gmra.mrb[0].mxu0 %v640
  %v679 = vpop.f32.mrb[0].mxu0
  %v680 = vadd.f32 0.0, %v679
  %v681 = vpop.f32.mrb[0].mxu0
  %v682 = vpop.f32.mrb[0].mxu0
  %v683 = vpop.f32.mrb[0].mxu0
  %684 = vdwg.mxu0
  %vm685 = vcmask 64512
  %686 = vst.msk [vmem:[%s2] sm:$0xff] %vm685, %v82
  %687 = vst.msk [vmem:[%s2 + $0x8] sm:$0xff] %vm685, %v128
  %688 = vst.msk [vmem:[%s2 + $0x10] sm:$0xff] %vm685, %v174
  %689 = vst.msk [vmem:[%s2 + $0x18] sm:$0xff] %vm685, %v220
  %690 = vst.msk [vmem:[%s2 + $0x20] sm:$0xff] %vm685, %v266
  %691 = vst.msk [vmem:[%s2 + $0x28] sm:$0xff] %vm685, %v312
  %692 = vst.msk [vmem:[%s2 + $0x30] sm:$0xff] %vm685, %v358
  %693 = vst.msk [vmem:[%s2 + $0x38] sm:$0xff] %vm685, %v404
  %694 = vst.msk [vmem:[%s2 + $0x40] sm:$0xff] %vm685, %v450
  %695 = vst.msk [vmem:[%s2 + $0x48] sm:$0xff] %vm685, %v496
  %696 = vst.msk [vmem:[%s2 + $0x50] sm:$0xff] %vm685, %v542
  %697 = vst.msk [vmem:[%s2 + $0x58] sm:$0xff] %vm685, %v588
  %698 = vst.msk [vmem:[%s2 + $0x60] sm:$0xff] %vm685, %v634
  %699 = vst.msk [vmem:[%s2 + $0x68] sm:$0xff] %vm685, %v680
  // Predicated region
  $region10: #{crf_model_forward.4} parent=0 // pred_check
    _
  $region11: #{crf_model_forward.4} parent=0 // pred_check_branch
    %701 = sbr.rel (0) target = $region13
  $region12: #{crf_model_forward.4} parent=0 // pred_region
    _
  $region13: #{crf_model_forward.4} parent=0 // pred_fallthru
    _
  // Predicated region
  $region14: #{crf_model_forward.4} parent=0 // pred_check
    _
  $region15: #{crf_model_forward.4} parent=0 // pred_check_branch
    %703 = sbr.rel (0) target = $region17
  $region16: #{crf_model_forward.4} parent=0 // pred_region
    _
  $region17: #{crf_model_forward.4} parent=0 // pred_fallthru
    _

// kernel: crf_model_forward.5
$region0: #{crf_model_forward.5}
  #allocation0 [shape = 'u32[]', space=smem, size = 0x4, offset = 0x4, fixed_abs, tag = 'smem constant byte address 0x4 - core index']
  #allocation1 [shape = 'u32[144,128]{1,0:T(1,128)}', space=vmem, size = 0x12000, scoped, tag = 'internal scratch']
  #allocation2 [shape = 'f32[1,8]{1,0:T(1,128)}', space=vmem, size = 0x200, scoped, tag = 'scratch operand']
  %s0 = inlined_call_operand.vmem [shape: f32[2,8,1,8], index: 0, kind: input, shape index: {}]
  %s1 = inlined_call_operand.vmem [shape: f32[2,7,8,8], index: 1, kind: input, shape index: {}]
  %s2 = inlined_call_operand.vmem [shape: f32[2,8,1,8], index: 2, kind: input, shape index: {}]
  %s3 = inlined_call_operand.vmem [shape: f32[2,1,128], index: 3, kind: output, shape index: {}]
  %s4 = sld [smem:[#allocation0]]
  $region52: #{crf_model_forward.5} parent=0
    _
  %s6 = ssub.s32 1, %s4
  %s7 = scalar_select 0, %s6, %s4
  loop: start=0, step=1, limit=4
  $region2: #{crf_model_forward.5} parent=0 // loop_pre_header
    _
  $region3: #{crf_model_forward.5} parent=0 // loop_header
    %s9 = sphi 0, %s13
    %p10 = scmp.ge.s32.totalorder %s9, 4
    %s19 = sphi 0, %s21
    %s22 = sphi 0, %s19
    %s23 = sphi 0, %s22
    %s39 = sphi 0, %s23
    %s45 = sphi 0, %s47
    %s48 = sphi 0, %s45
    %s49 = sphi 0, %s48
    %s65 = sphi 0, %s49
    %s71 = sphi 0, %s73
    %s74 = sphi 0, %s71
    %s75 = sphi 0, %s74
    %s91 = sphi 0, %s75
    %s97 = sphi 0, %s99
    %s100 = sphi 0, %s97
    %s101 = sphi 0, %s100
    %s117 = sphi 0, %s101
  $region4: #{crf_model_forward.5} parent=0 // loop_header_branch
    %12 = sbr.rel (%p10) target = $region8
  $region5: #{crf_model_forward.5} parent=0 // loop_body
    %s14 = ssub.s32 %s9, 1
    %s15 = ssub.s32 %s9, 2
    %s16 = sadd.s32 %s9, 1
    %s17 = ssub.s32 %s9, %s16
    %p18 = scmp.eq.s32.totalorder %s17, 0
    %s20 = sadd.s32 %s19, 1
    %s21 = scalar_select %p18, %s19, %s20
    %p24 = pneg %p18
    %p25 = scmp.eq.s32.totalorder %s9, 1
    %p26 = por %p24, %p25
    %p27 = scmp.ne.s32.totalorder %s19, %s22
    %p28 = scmp.eq.s32.totalorder %s9, 0
    %p29 = por %p27, %p28
    %p30 = scmp.ne.s32.totalorder %s19, %s22
    %p31 = scmp.eq.s32.totalorder %s14, 1
    %p32 = por %p30, %p31
    %p33 = scmp.ne.s32.totalorder %s22, %s23
    %p34 = scmp.eq.s32.totalorder %s14, 0
    %p35 = por %p33, %p34
    %p36 = scmp.ne.s32.totalorder %s22, %s23
    %p37 = scmp.eq.s32.totalorder %s15, 1
    %p38 = por %p36, %p37
    %p40 = scmp.ne.s32.totalorder %s23, %s39
    %p41 = scmp.eq.s32.totalorder %s15, 0
    %p42 = por %p40, %p41
    %s43 = ssub.s32 %s9, %s16
    %p44 = scmp.eq.s32.totalorder %s43, 0
    %s46 = sadd.s32 %s45, 1
    %s47 = scalar_select %p44, %s45, %s46
    %p50 = pneg %p44
    %p51 = scmp.eq.s32.totalorder %s9, 1
    %p52 = por %p50, %p51
    %p53 = scmp.ne.s32.totalorder %s45, %s48
    %p54 = scmp.eq.s32.totalorder %s9, 0
    %p55 = por %p53, %p54
    %p56 = scmp.ne.s32.totalorder %s45, %s48
    %p57 = scmp.eq.s32.totalorder %s14, 1
    %p58 = por %p56, %p57
    %p59 = scmp.ne.s32.totalorder %s48, %s49
    %p60 = scmp.eq.s32.totalorder %s14, 0
    %p61 = por %p59, %p60
    %p62 = scmp.ne.s32.totalorder %s48, %s49
    %p63 = scmp.eq.s32.totalorder %s15, 1
    %p64 = por %p62, %p63
    %p66 = scmp.ne.s32.totalorder %s49, %s65
    %p67 = scmp.eq.s32.totalorder %s15, 0
    %p68 = por %p66, %p67
    %s69 = ssub.s32 %s9, %s16
    %p70 = scmp.eq.s32.totalorder %s69, 0
    %s72 = sadd.s32 %s71, 1
    %s73 = scalar_select %p70, %s71, %s72
    %p76 = pneg %p70
    %p77 = scmp.eq.s32.totalorder %s9, 1
    %p78 = por %p76, %p77
    %p79 = scmp.ne.s32.totalorder %s71, %s74
    %p80 = scmp.eq.s32.totalorder %s9, 0
    %p81 = por %p79, %p80
    %p82 = scmp.ne.s32.totalorder %s71, %s74
    %p83 = scmp.eq.s32.totalorder %s14, 1
    %p84 = por %p82, %p83
    %p85 = scmp.ne.s32.totalorder %s74, %s75
    %p86 = scmp.eq.s32.totalorder %s14, 0
    %p87 = por %p85, %p86
    %p88 = scmp.ne.s32.totalorder %s74, %s75
    %p89 = scmp.eq.s32.totalorder %s15, 1
    %p90 = por %p88, %p89
    %p92 = scmp.ne.s32.totalorder %s75, %s91
    %p93 = scmp.eq.s32.totalorder %s15, 0
    %p94 = por %p92, %p93
    %s95 = ssub.s32 %s9, %s16
    %p96 = scmp.eq.s32.totalorder %s95, 0
    %s98 = sadd.s32 %s97, 1
    %s99 = scalar_select %p96, %s97, %s98
    %p102 = pneg %p96
    %p103 = scmp.eq.s32.totalorder %s9, 1
    %p104 = por %p102, %p103
    %p105 = scmp.ne.s32.totalorder %s97, %s100
    %p106 = scmp.eq.s32.totalorder %s9, 0
    %p107 = por %p105, %p106
    %p108 = scmp.ne.s32.totalorder %s97, %s100
    %p109 = scmp.eq.s32.totalorder %s14, 1
    %p110 = por %p108, %p109
    %p111 = scmp.ne.s32.totalorder %s100, %s101
    %p112 = scmp.eq.s32.totalorder %s14, 0
    %p113 = por %p111, %p112
    %p114 = scmp.ne.s32.totalorder %s100, %s101
    %p115 = scmp.eq.s32.totalorder %s15, 1
    %p116 = por %p114, %p115
    %p118 = scmp.ne.s32.totalorder %s101, %s117
    %p119 = scmp.eq.s32.totalorder %s15, 0
    %p120 = por %p118, %p119
    %p121 = scmp.le.s32.totalorder 1, %s9
    %p122 = scmp.lt.s32.totalorder %s9, 3
    %p123 = pnand %p121, %p122
    %p124 = pneg %p123
    // Predicated region
    $region9: #{crf_model_forward.5} parent=5 // pred_check
      _
    $region10: #{crf_model_forward.5} parent=5 // pred_check_branch
      %126 = sbr.rel (%p123) target = $region12
    $region11: #{crf_model_forward.5} parent=5 // pred_region
      %s127 = ssub.s32 %s9, 1
    $region12: #{crf_model_forward.5} parent=5 // pred_fallthru
      _
    %p128 = scmp.lt.s32.totalorder %s9, 2
    // Predicated region
    $region13: #{crf_model_forward.5} parent=5 // pred_check
      %p129 = pneg %p128
    $region14: #{crf_model_forward.5} parent=5 // pred_check_branch
      %131 = sbr.rel (%p129) target = $region16
    $region15: #{crf_model_forward.5} parent=5 // pred_region
      // Predicated region
      $region17: #{crf_model_forward.5} parent=15 // pred_check
        %p132 = pneg %p29
      $region18: #{crf_model_forward.5} parent=15 // pred_check_branch
        %134 = sbr.rel (%p132) target = $region20
      $region19: #{crf_model_forward.5} parent=15 // pred_region
        %p135 = scmp.lt.s32.totalorder %s9, 1
        %s136 = scalar_select %p135, %s9, 1
        %s137 = smul.addr %s136, 8
        %s138 = scalar_lea.vmem %s0, %s137
      $region20: #{crf_model_forward.5} parent=15 // pred_fallthru
        _
      // Predicated region
      $region21: #{crf_model_forward.5} parent=15 // pred_check
        %p139 = pneg %p55
      $region22: #{crf_model_forward.5} parent=15 // pred_check_branch
        %141 = sbr.rel (%p139) target = $region24
      $region23: #{crf_model_forward.5} parent=15 // pred_region
        %p142 = scmp.lt.s32.totalorder %s9, 1
        %s143 = scalar_select %p142, %s9, 1
        %s144 = smul.addr %s143, 7
        %s145 = smul.addr %s144, 8
        %s146 = scalar_lea.vmem %s1, %s145
      $region24: #{crf_model_forward.5} parent=15 // pred_fallthru
        _
      // Predicated region
      $region25: #{crf_model_forward.5} parent=15 // pred_check
        %p147 = pneg %p81
      $region26: #{crf_model_forward.5} parent=15 // pred_check_branch
        %149 = sbr.rel (%p147) target = $region28
      $region27: #{crf_model_forward.5} parent=15 // pred_region
        %p150 = scmp.lt.s32.totalorder %s9, 1
        %s151 = scalar_select %p150, %s9, 1
        %s152 = smul.addr %s151, 8
        %s153 = scalar_lea.vmem %s2, %s152
      $region28: #{crf_model_forward.5} parent=15 // pred_fallthru
        _
    $region16: #{crf_model_forward.5} parent=5 // pred_fallthru
      _
    %p154 = scmp.le.s32.totalorder 1, %s9
    %p155 = scmp.lt.s32.totalorder %s9, 3
    %p156 = pnand %p154, %p155
    %p157 = pneg %p156
    // Predicated region
    $region29: #{crf_model_forward.5} parent=5 // pred_check
      _
    $region30: #{crf_model_forward.5} parent=5 // pred_check_branch
      %159 = sbr.rel (%p156) target = $region32
    $region31: #{crf_model_forward.5} parent=5 // pred_region
      %s160 = ssub.s32 %s9, 1
      %p161 = scmp.lt.s32.totalorder %s14, 1
      %s162 = scalar_select %p161, %s14, 1
      %s163 = smul.addr %s162, 8
      %s164 = scalar_lea.vmem %s0, %s163
      %p165 = pneg %p35
      %p166 = pneg %p32
      %p167 = scmp.lt.s32.totalorder %s14, 1
      %s168 = scalar_select %p167, %s14, 1
      %s169 = smul.addr %s168, 7
      %s170 = smul.addr %s169, 8
      %s171 = scalar_lea.vmem %s1, %s170
      %p172 = pneg %p61
      %p173 = pneg %p58
      %p174 = scmp.lt.s32.totalorder %s14, 1
      %s175 = scalar_select %p174, %s14, 1
      %s176 = smul.addr %s175, 8
      %s177 = scalar_lea.vmem %s2, %s176
      %p178 = pneg %p87
      %p179 = pneg %p84
      %p180 = pneg %p113
      %p181 = pneg %p110
      %p182 = scmp.lt.s32.totalorder %s14, 1
      %s183 = scalar_select %p182, %s14, 1
      %s184 = scalar_lea.vmem %s3, %s183
      %p185 = scmp.lt.s32.totalorder %s14, 1
      %s186 = scalar_select %p185, %s14, 1
      %s187 = smul.addr %s186, 8
      %s188 = scalar_lea.vmem %s0, %s187
      %p189 = scmp.lt.s32.totalorder %s14, 1
      %s190 = scalar_select %p189, %s14, 1
      %s191 = smul.addr %s190, 7
      %s192 = smul.addr %s191, 8
      %s193 = scalar_lea.vmem %s1, %s192
      %p194 = scmp.lt.s32.totalorder %s14, 1
      %s195 = scalar_select %p194, %s14, 1
      %s196 = smul.addr %s195, 8
      %s197 = scalar_lea.vmem %s2, %s196
      %p198 = scmp.lt.s32.totalorder %s14, 1
      %s199 = scalar_select %p198, %s14, 1
      %s200 = scalar_lea.vmem %s3, %s199
      %v201 = vld [vmem:[%s188] sm:$0x1]
      %vm202 = vcmask 57344
      %203 = vst.msk [vmem:[#allocation2] sm:$0x1] %vm202, %v201
      loop: start=1, step=1, limit=8
      $region33: #{crf_model_forward.5} parent=31 // loop_pre_header
        _
      $region34: #{crf_model_forward.5} parent=31 // loop_header
        %s205 = sphi 1, %s209
        %p206 = scmp.ge.s32.totalorder %s205, 8
      $region35: #{crf_model_forward.5} parent=31 // loop_header_branch
        %208 = sbr.rel (%p206) target = $region39
      $region36: #{crf_model_forward.5} parent=31 // loop_body
        %v210 = vld [vmem:[#allocation2] sm:$0x1]
        %211 = vxpose.xlu0.b32.start [1/16] %v210, 128
        %212 = vxpose.xlu0.b32.cont [2/16] 0.0, 128
        %213 = vxpose.xlu0.b32.cont [3/16] 0.0, 128
        %214 = vxpose.xlu0.b32.cont [4/16] 0.0, 128
        %215 = vxpose.xlu0.b32.cont [5/16] 0.0, 128
        %216 = vxpose.xlu0.b32.cont [6/16] 0.0, 128
        %217 = vxpose.xlu0.b32.cont [7/16] 0.0, 128
        %218 = vxpose.xlu0.b32.cont [8/16] 0.0, 128
        %219 = vxpose.xlu0.b32.cont [9/16] 0.0, 128
        %220 = vxpose.xlu0.b32.cont [10/16] 0.0, 128
        %221 = vxpose.xlu0.b32.cont [11/16] 0.0, 128
        %222 = vxpose.xlu0.b32.cont [12/16] 0.0, 128
        %223 = vxpose.xlu0.b32.cont [13/16] 0.0, 128
        %224 = vxpose.xlu0.b32.cont [14/16] 0.0, 128
        %225 = vxpose.xlu0.b32.cont [15/16] 0.0, 128
        %226 = vxpose.xlu0.b32.end [16/16] 0.0, 128
        %v227 = vpop.trf.xlu0
        %v228 = vpop.trf.xlu0
        %v229 = vpop.trf.xlu0
        %v230 = vpop.trf.xlu0
        %v231 = vpop.trf.xlu0
        %v232 = vpop.trf.xlu0
        %v233 = vpop.trf.xlu0
        %v234 = vpop.trf.xlu0
        %v235 = vpop.trf.xlu0
        %v236 = vpop.trf.xlu0
        %v237 = vpop.trf.xlu0
        %v238 = vpop.trf.xlu0
        %v239 = vpop.trf.xlu0
        %v240 = vpop.trf.xlu0
        %v241 = vpop.trf.xlu0
        %v242 = vpop.trf.xlu0
        %s243 = ssub.s32 %s205, 1
        %s244 = smul.u32 %s243, 8
        %s245 = scalar_lea.vmem %s193, %s244
        %v246 = vld [vmem:[%s245] sm:$0xff]
        %248 = vset.pattern.permute.xlu0 0
        %249 = vperm.xlu0 %248, %v227
        %v250 = vpop.permute.xlu0 %249
        %v252 = vadd.f32 %v250, %v246
        %vm253 = vcmask 64512
        %v254 = vsel %vm253, %v252, -inf
        %v255 = vrot.slane %v254, 4
        %v256 = vmax.f32 %v254, %v255
        %v257 = vrot.slane %v256, 2
        %v258 = vmax.f32 %v256, %v257
        %v259 = vrot.slane %v258, 1
        %v260 = vmax.f32 %v258, %v259
        %v261 = vsub.f32 %v252, %v260
        %v262 = vmul.f32 %v261, 1.442695
        %v263 = vpow.pop %v262
        %v264 = vsel %vm253, %v263, 0.0
        %v265 = vrot.slane %v264, 4
        %v266 = vadd.f32 %v264, %v265
        %v267 = vrot.slane %v266, 2
        %v268 = vadd.f32 %v266, %v267
        %v269 = vrot.slane %v268, 1
        %v270 = vadd.f32 %v268, %v269
        %v271 = vlog2.pop %v270
        %v272 = vmul.f32 %v271, 0.6931472
        %v273 = vadd.f32 %v260, %v272
        %s274 = scalar_lea.vmem %s188, %s205
        %v275 = vld [vmem:[%s274] sm:$0x1]
        %v276 = vadd.f32 %v273, %v275
        %s277 = scalar_lea.vmem %s197, %s205
        %v278 = vld [vmem:[%s277] sm:$0x1]
        %vm279 = vcmp.gt.f32.partialorder %v278, 0.5
        %v280 = vsel %vm279, %v276, %v210
        %281 = vst.msk [vmem:[#allocation2] sm:$0x1] %vm202, %v280
      $region37: #{crf_model_forward.5} parent=31 // loop_footer
        %s209 = sadd.s32 1, %s205
      $region38: #{crf_model_forward.5} parent=31 // loop_footer_branch
        %204 = sbr.rel target = $region34
      $region39: #{crf_model_forward.5} parent=31 // loop_exit
        _
      %v282 = vld [vmem:[#allocation2] sm:$0x1]
      %v283 = vsel %vm202, %v282, -inf
      %284 = vmax.xlane.f32.xlu0 %v283
      %v285 = vpop.xlane.xlu0 %284
      %v286 = vsub.f32 %v282, %v285
      %v287 = vmul.f32 %v286, 1.442695
      %v288 = vpow.pop %v287
      %v289 = vsel %vm202, %v288, 0.0
      %290 = vadd.xlane.f32.xlu0 %v289
      %v291 = vpop.xlane.xlu0 %290
      %v292 = vlog2.pop %v291
      %v293 = vmul.f32 %v292, 0.6931472
      %v294 = vadd.f32 %v285, %v293
      %295 = vst [vmem:[%s200] sm:$0x1] %v294
      %p296 = scmp.lt.s32.totalorder %s14, 1
      %s297 = scalar_select %p296, %s14, 1
      %s298 = scalar_lea.vmem %s3, %s297
      // Predicated region
      $region40: #{crf_model_forward.5} parent=31 // pred_check
        %p299 = pneg %p110
      $region41: #{crf_model_forward.5} parent=31 // pred_check_branch
        %301 = sbr.rel (%p299) target = $region43
      $region42: #{crf_model_forward.5} parent=31 // pred_region
        _
      $region43: #{crf_model_forward.5} parent=31 // pred_fallthru
        _
    $region32: #{crf_model_forward.5} parent=5 // pred_fallthru
      _
    %p302 = scmp.le.s32.totalorder 2, %s9
    // Predicated region
    $region44: #{crf_model_forward.5} parent=5 // pred_check
      %p303 = pneg %p302
    $region45: #{crf_model_forward.5} parent=5 // pred_check_branch
      %305 = sbr.rel (%p303) target = $region47
    $region46: #{crf_model_forward.5} parent=5 // pred_region
      %s306 = ssub.s32 %s9, 2
      // Predicated region
      $region48: #{crf_model_forward.5} parent=46 // pred_check
        %p307 = pneg %p116
      $region49: #{crf_model_forward.5} parent=46 // pred_check_branch
        %309 = sbr.rel (%p307) target = $region51
      $region50: #{crf_model_forward.5} parent=46 // pred_region
        %p310 = scmp.lt.s32.totalorder %s15, 1
        %s311 = scalar_select %p310, %s15, 1
        %s312 = scalar_lea.vmem %s3, %s311
      $region51: #{crf_model_forward.5} parent=46 // pred_fallthru
        _
    $region47: #{crf_model_forward.5} parent=5 // pred_fallthru
      _
  $region6: #{crf_model_forward.5} parent=0 // loop_footer
    %s13 = sadd.s32 1, %s9
  $region7: #{crf_model_forward.5} parent=0 // loop_footer_branch
    %8 = sbr.rel target = $region3
  $region8: #{crf_model_forward.5} parent=0 // loop_exit
    _

</llo_original>
